<compile_context>
chip_gen: v6e
topology: v6e:2x2x1
jax: 0.10.0
libtpu: 0.0.40
codegen_flags: <defaults>
</compile_context>

<pallas_src>
import functools
import math

import jax
import jax.numpy as jnp
from jax.experimental import pallas as pl
from jax.experimental.pallas import tpu as pltpu


TM_MAX = 512            # M tile (rows of the im2col matrix)
TN_MAX = 512            # N tile (output channels)
TK_MAX = 512            # K tile (reduction)
POOL_TM_MAX = 1024      # row tile for the pooling kernels
_VMEM_LIMIT = 32 * 1024 * 1024   # safe on v5e/v6e (128 MiB) and v7x (64 MiB)


# ----------------------------------------------------------------------------
# helpers
# ----------------------------------------------------------------------------
def round_up(a, m):
    return ((a + m - 1) // m) * m


def pick_tile(padded, cap):
    """Largest of (512, 256, 128) <= cap that divides `padded` (a x128)."""
    for t in (512, 256, 128):
        if t <= cap and padded % t == 0:
            return t
    return 128


def extract_patches(x, kh, kw, stride, pad, pad_value, taps_axis=3):
    """im2col glue (plain JAX, fused by XLA under jit).

    x: (N, H, W, C) -> stack of kh*kw shifted/strided views.
      taps_axis=3 -> (N, OH, OW, kh*kw, C)   (conv: reshape to (M, kh*kw*C))
      taps_axis=0 -> (kh*kw, N, OH, OW, C)   (maxpool: taps on the lead axis)
    """
    if pad > 0:
        x = jnp.pad(x, ((0, 0), (pad, pad), (pad, pad), (0, 0)),
                    constant_values=pad_value)
    N, H, W, C = x.shape
    OH = (H - kh) // stride + 1
    OW = (W - kw) // stride + 1
    taps = []
    for dh in range(kh):
        for dw in range(kw):
            sl = jax.lax.slice(
                x,
                (0, dh, dw, 0),
                (N, dh + stride * (OH - 1) + 1, dw + stride * (OW - 1) + 1, C),
                (1, stride, stride, 1))
            taps.append(sl)
    return jnp.stack(taps, axis=taps_axis)


# ----------------------------------------------------------------------------
# Pallas kernels
# ----------------------------------------------------------------------------
def _mm_bias_kernel(x_ref, w_ref, b_ref, o_ref, acc_ref, *, relu):
    """(m, n, k)-tiled bf16 matmul; bias (+ReLU) epilogue at the last k step.

    BN scale is already folded into the bf16 weights at init time.
    """
    k = pl.program_id(2)

    @pl.when(k == 0)
    def _():
        acc_ref[...] = jnp.zeros_like(acc_ref)

    acc_ref[...] += jnp.dot(x_ref[...], w_ref[...],
                            preferred_element_type=jnp.float32)

    @pl.when(k == pl.num_programs(2) - 1)
    def _():
        y = acc_ref[...] + b_ref[...]
        if relu:
            y = jnp.maximum(y, 0.0)
        o_ref[...] = y.astype(o_ref.dtype)


def _mm_bias_res_kernel(x_ref, w_ref, b_ref, r_ref, o_ref, acc_ref, *, relu):
    """Same as above, with the residual add fused into the epilogue."""
    k = pl.program_id(2)

    @pl.when(k == 0)
    def _():
        acc_ref[...] = jnp.zeros_like(acc_ref)

    acc_ref[...] += jnp.dot(x_ref[...], w_ref[...],
                            preferred_element_type=jnp.float32)

    @pl.when(k == pl.num_programs(2) - 1)
    def _():
        y = acc_ref[...] + b_ref[...] + r_ref[...].astype(jnp.float32)
        if relu:
            y = jnp.maximum(y, 0.0)
        o_ref[...] = y.astype(o_ref.dtype)


def maxpool_kernel(x_ref, o_ref):
    # x_ref: (9, tm, C).  Unrolled elementwise max over the 9 taps (VPU only).
    m = x_ref[0]
    for t in range(1, x_ref.shape[0]):
        m = jnp.maximum(m, x_ref[t])
    o_ref[...] = m


def avgpool_kernel(x_ref, o_ref):
    # x_ref: (1, HW, C) -> mean over spatial, accumulated in f32.
    o_ref[...] = jnp.mean(x_ref[...].astype(jnp.float32), axis=1,
                          keepdims=True)


# ----------------------------------------------------------------------------
# fused matmul (+folded-BN bias, +optional residual, +optional ReLU)
# ----------------------------------------------------------------------------
def _matmul_core(xm, wp, bp, rm, *, relu, out_dtype):
    """out = act((xm @ wp) + bp [+ rm]) with (m, n, k) tiling.

    xm: (M, K) bf16 activations (zero-padded to (Mp, Kp) here).
    wp: (Kp, Np) bf16 (BN scale folded in), bp: (1, Np) f32 -- padded at init.
    rm: optional (M, N) bf16 residual.
    Returns the padded (Mp, Np) result (caller slices).
    """
    M, K = xm.shape
    Kp, Np = wp.shape
    tm = min(TM_MAX, round_up(M, 16))          # bf16 sublane packing -> x16
    Mp = round_up(M, tm)
    tn = pick_tile(Np, TN_MAX)
    tk = pick_tile(Kp, TK_MAX)
    grid = (Mp // tm, Np // tn, Kp // tk)

    x_p = jnp.pad(xm, ((0, Mp - M), (0, Kp - K)))

    x_spec = pl.BlockSpec((tm, tk), lambda i, j, k: (i, k))
    w_spec = pl.BlockSpec((tk, tn), lambda i, j, k: (k, j))
    b_spec = pl.BlockSpec((1, tn), lambda i, j, k: (0, j))
    o_spec = pl.BlockSpec((tm, tn), lambda i, j, k: (i, j))
    r_spec = pl.BlockSpec((tm, tn), lambda i, j, k: (i, j))

    compiler_params = pltpu.CompilerParams(
        dimension_semantics=("parallel", "parallel", "arbitrary"),
        vmem_limit_bytes=_VMEM_LIMIT)
    out_shape = jax.ShapeDtypeStruct((Mp, Np), out_dtype)
    scratch = [pltpu.VMEM((tm, tn), jnp.float32)]

    if rm is None:
        return pl.pallas_call(
            functools.partial(_mm_bias_kernel, relu=relu),
            out_shape=out_shape,
            grid_spec=pltpu.PrefetchScalarGridSpec(
                num_scalar_prefetch=0, grid=grid,
                in_specs=[x_spec, w_spec, b_spec],
                out_specs=o_spec, scratch_shapes=scratch),
            compiler_params=compiler_params,
        )(x_p, wp, bp)

    r_p = jnp.pad(rm.astype(jnp.bfloat16),
                  ((0, Mp - M), (0, Np - rm.shape[1])))
    return pl.pallas_call(
        functools.partial(_mm_bias_res_kernel, relu=relu),
        out_shape=out_shape,
        grid_spec=pltpu.PrefetchScalarGridSpec(
            num_scalar_prefetch=0, grid=grid,
            in_specs=[x_spec, w_spec, b_spec, r_spec],
            out_specs=o_spec, scratch_shapes=scratch),
        compiler_params=compiler_params,
    )(x_p, wp, bp, r_p)


# ----------------------------------------------------------------------------
# conv + bn (+residual, +relu) via im2col + fused matmul kernel
# ----------------------------------------------------------------------------
@functools.partial(
    jax.jit,
    static_argnames=("kh", "kw", "stride", "pad", "relu", "n_true"))
def _conv_bn_impl(x, wp, bp, residual, *, kh, kw, stride, pad, relu, n_true):
    """x: NHWC (f32 or bf16).  residual: optional NHWC bf16, n_true channels.

    Output is NHWC bf16 (activations stay bf16 through the whole network).
    """
    xb = x.astype(jnp.bfloat16)               # bf16 MXU operands (half DMA)
    if kh == 1 and kw == 1 and pad == 0:
        # 1x1 conv: no im2col needed, just (optional) stride + reshape.
        if stride > 1:
            xb = xb[:, ::stride, ::stride, :]
        N, OH, OW, Cin = xb.shape
        M = N * OH * OW
        xm = xb.reshape(M, Cin)
    else:
        patches = extract_patches(xb, kh, kw, stride, pad, 0.0)
        N, OH, OW, KK, Cin = patches.shape
        M = N * OH * OW
        xm = patches.reshape(M, KK * Cin)
    rm = None if residual is None else residual.reshape(M, n_true)
    y = _matmul_core(xm, wp, bp, rm, relu=relu, out_dtype=jnp.bfloat16)
    return y[:M, :n_true].reshape(N, OH, OW, n_true)


def conv_bn(x, p, *, stride, pad, relu, residual=None):
    return _conv_bn_impl(x, p["w"], p["b"], residual,
                         kh=p["kh"], kw=p["kw"], stride=stride, pad=pad,
                         relu=relu, n_true=p["n"])


# ----------------------------------------------------------------------------
# pooling kernels
# ----------------------------------------------------------------------------
@jax.jit
def maxpool_3x3_s2(x):
    """PyTorch MaxPool2d(kernel=3, stride=2, padding=1) on NHWC (bf16)."""
    N, H, W, C = x.shape
    taps = extract_patches(x, 3, 3, 2, 1, -jnp.inf, taps_axis=0)
    _, _, OH, OW, _ = taps.shape
    M = N * OH * OW
    tm = min(POOL_TM_MAX, round_up(M, 16))
    Mp = round_up(M, tm)
    pm = taps.reshape(9, M, C)
    if Mp != M:
        pm = jnp.pad(pm, ((0, 0), (0, Mp - M), (0, 0)))
    out = pl.pallas_call(
        maxpool_kernel,
        out_shape=jax.ShapeDtypeStruct((Mp, C), x.dtype),
        grid=(Mp // tm,),
        in_specs=[pl.BlockSpec((9, tm, C), lambda i: (0, i, 0))],
        out_specs=pl.BlockSpec((tm, C), lambda i: (i, 0)),
        compiler_params=pltpu.CompilerParams(
            dimension_semantics=("parallel",),
            vmem_limit_bytes=_VMEM_LIMIT),
    )(pm)
    return out[:M].reshape(N, OH, OW, C)


@jax.jit
def global_avgpool(x):
    """AdaptiveAvgPool2d((1, 1)) on NHWC -> (N, C) in f32."""
    N, H, W, C = x.shape
    xm = x.reshape(N, H * W, C)
    out = pl.pallas_call(
        avgpool_kernel,
        out_shape=jax.ShapeDtypeStruct((N, 1, C), jnp.float32),
        grid=(N,),
        in_specs=[pl.BlockSpec((1, H * W, C), lambda i: (i, 0, 0))],
        out_specs=pl.BlockSpec((1, 1, C), lambda i: (i, 0, 0)),
        compiler_params=pltpu.CompilerParams(
            dimension_semantics=("parallel",),
            vmem_limit_bytes=_VMEM_LIMIT),
    )(xm)
    return out.reshape(N, C)


# ----------------------------------------------------------------------------
# final linear layer (reuses the fused matmul kernel; identity "scale")
# ----------------------------------------------------------------------------
@functools.partial(jax.jit, static_argnames=("n_true",))
def _dense_impl(x, wp, bp, *, n_true):
    y = _matmul_core(x.astype(jnp.bfloat16), wp, bp, None, relu=False,
                     out_dtype=jnp.float32)
    return y[:x.shape[0], :n_true]


def dense(x, p):
    return _dense_impl(x, p["w"], p["b"], n_true=p["n"])


# ----------------------------------------------------------------------------
# deterministic parameter construction (synthetic "pretrained" weights),
# packed once at init into matmul-ready padded bf16 form with BN folded in.
# ----------------------------------------------------------------------------
def _key_iter(key):
    while True:
        key, sub = jax.random.split(key)
        yield sub


def pack_matmul_params(wm, scale, bias, kh=1, kw=1):
    """Fold BN scale into (K, N) weights, pad / cast once at init."""
    K, N = wm.shape
    Kp = round_up(K, 128)
    Np = round_up(N, 128)
    w_folded = wm * scale[None, :]            # BN scale folded into weights
    return {
        "w": jnp.pad(w_folded, ((0, Kp - K), (0, Np - N))).astype(jnp.bfloat16),
        "b": jnp.pad(bias, (0, Np - N)).reshape(1, Np).astype(jnp.float32),
        "n": int(N),
        "kh": int(kh),
        "kw": int(kw),
    }


def make_conv_bn(keys, cout, cin, kh, kw, eps=1e-5):
    fan_in = cin * kh * kw
    std = math.sqrt(2.0 / fan_in)
    w = jax.random.normal(next(keys), (cout, cin, kh, kw), jnp.float32) * std
    gamma = 1.0 + 0.1 * jax.random.normal(next(keys), (cout,), jnp.float32)
    beta = 0.1 * jax.random.normal(next(keys), (cout,), jnp.float32)
    mean = 0.1 * jax.random.normal(next(keys), (cout,), jnp.float32)
    var = jax.random.uniform(next(keys), (cout,), jnp.float32, 0.5, 1.5)
    scale = gamma / jnp.sqrt(var + eps)
    bias = beta - mean * scale
    # (Cout, Cin, KH, KW) -> (KH*KW*Cin, Cout), matching im2col column order.
    wm = jnp.transpose(w, (2, 3, 1, 0)).reshape(kh * kw * cin, cout)
    return pack_matmul_params(wm, scale, bias, kh, kw)


def make_layer(keys, inplanes, planes, blocks, stride):
    layer = []
    for b in range(blocks):
        s = stride if b == 0 else 1
        blk = {"stride": s}
        blk["conv1"] = make_conv_bn(keys, planes, inplanes, 1, 1)
        blk["conv2"] = make_conv_bn(keys, planes, planes, 3, 3)
        blk["conv3"] = make_conv_bn(keys, planes * 4, planes, 1, 1)
        if b == 0 and (s != 1 or inplanes != planes * 4):
            blk["downsample"] = make_conv_bn(keys, planes * 4, inplanes, 1, 1)
        layer.append(blk)
        inplanes = planes * 4
    return layer, inplanes


def init_resnet50(key, in_channels=3, feature_dim=256):
    keys = _key_iter(key)
    params = {}
    params["stem"] = make_conv_bn(keys, 64, in_channels, 7, 7)
    inplanes = 64
    layers = []
    for planes, blocks, stride in ((64, 3, 1), (128, 4, 2),
                                   (256, 6, 2), (512, 3, 2)):
        layer, inplanes = make_layer(keys, inplanes, planes, blocks, stride)
        layers.append(layer)
    params["layers"] = layers
    # fc: Linear(2048, feature_dim) -- PyTorch weight (out, in) + bias.
    bound = 1.0 / math.sqrt(2048)
    wfc = jax.random.uniform(next(keys), (feature_dim, 2048), jnp.float32,
                             -bound, bound)
    bfc = jax.random.uniform(next(keys), (feature_dim,), jnp.float32,
                             -bound, bound)
    params["fc"] = pack_matmul_params(
        wfc.T, jnp.ones((feature_dim,), jnp.float32), bfc)
    return params


# ----------------------------------------------------------------------------
# forward pass
# ----------------------------------------------------------------------------
def bottleneck(x, blk):
    out = conv_bn(x, blk["conv1"], stride=1, pad=0, relu=True)
    out = conv_bn(out, blk["conv2"], stride=blk["stride"], pad=1, relu=True)
    if "downsample" in blk:
        identity = conv_bn(x, blk["downsample"], stride=blk["stride"],
                           pad=0, relu=False)
    else:
        identity = x
    # Residual add + ReLU fused into the conv3 matmul epilogue.
    return conv_bn(out, blk["conv3"], stride=1, pad=0, relu=True,
                   residual=identity)


def resnet50_forward(params, x_nchw):
    # Layout: NCHW input (PyTorch convention) -> NHWC internally, bf16 acts.
    x = jnp.transpose(x_nchw, (0, 2, 3, 1)).astype(jnp.float32)
    x = conv_bn(x, params["stem"], stride=2, pad=3, relu=True)
    x = maxpool_3x3_s2(x)
    for layer in params["layers"]:
        for blk in layer:
            x = bottleneck(x, blk)
    pooled = global_avgpool(x)              # (N, 2048) f32
    return dense(pooled, params["fc"])      # (N, feature_dim) f32


# ----------------------------------------------------------------------------
if __name__ == "__main__":
    key = jax.random.PRNGKey(0)
    pkey, xkey = jax.random.split(key)

    params = init_resnet50(pkey, in_channels=3, feature_dim=256)
    x = jax.random.normal(xkey, (2, 3, 32, 32), jnp.float32)  # NCHW

    y = resnet50_forward(params, x)
    y = jax.block_until_ready(y)

    assert y.shape == (2, 256), y.shape
    assert bool(jnp.all(jnp.isfinite(y)))
    print("KERNEL_OK")
</pallas_src>

<mosaic_0001>
module attributes {stable_mosaic.version = 11 : i64} {
  func.func @_mm_bias_kernel(%arg0: i32, %arg1: i32, %arg2: i32, %arg3: memref<512x256xbf16, #tpu.memory_space<vmem>>, %arg4: memref<256x128xbf16, #tpu.memory_space<vmem>>, %arg5: memref<1x128xf32, #tpu.memory_space<vmem>>, %arg6: memref<512x128xbf16, #tpu.memory_space<vmem>>, %arg7: memref<512x128xf32, #tpu.memory_space<vmem>>) attributes {dimension_semantics = [#tpu.dimension_semantics<parallel>, #tpu.dimension_semantics<parallel>, #tpu.dimension_semantics<arbitrary>], iteration_bounds = array<i64: 1, 1, 1>, scalar_prefetch = 0 : i64, scratch_operands = 1 : i64, tpu.core_type = #tpu.core_type<tc>, window_params = [{transform_indices = @transform_0, window_bounds = array<i64: 512, 256>}, {transform_indices = @transform_1, window_bounds = array<i64: 256, 128>}, {transform_indices = @transform_2, window_bounds = array<i64: 1, 128>}, {transform_indices = @transform_3, window_bounds = array<i64: 512, 128>}]} {
    %c0_i32 = arith.constant 0 : i32
    %0 = arith.cmpi eq, %arg2, %c0_i32 : i32
    %1 = arith.extui %0 : i1 to i32
    %c0_i32_0 = arith.constant 0 : i32
    %2 = arith.cmpi ne, %1, %c0_i32_0 : i32
    scf.if %2 {
      %cst_10 = arith.constant 0.000000e+00 : f32
      %12 = vector.broadcast %cst_10 : f32 to vector<512x128xf32>
      %c0_11 = arith.constant 0 : index
      %c0_12 = arith.constant 0 : index
      %13 = vector.load %arg7[%c0_11, %c0_12] : memref<512x128xf32, #tpu.memory_space<vmem>>, vector<512x128xf32>
      tpu.vector_store %arg7[%c0_11, %c0_12], %12 {strides = array<i32>} : memref<512x128xf32, #tpu.memory_space<vmem>>, vector<512x128xf32>,
    } else {
    }
    %c0 = arith.constant 0 : index
    %c0_1 = arith.constant 0 : index
    %3 = vector.load %arg7[%c0, %c0_1] : memref<512x128xf32, #tpu.memory_space<vmem>>, vector<512x128xf32>
    %c0_2 = arith.constant 0 : index
    %c0_3 = arith.constant 0 : index
    %4 = vector.load %arg3[%c0_2, %c0_3] : memref<512x256xbf16, #tpu.memory_space<vmem>>, vector<512x256xbf16>
    %c0_4 = arith.constant 0 : index
    %c0_5 = arith.constant 0 : index
    %5 = vector.load %arg4[%c0_4, %c0_5] : memref<256x128xbf16, #tpu.memory_space<vmem>>, vector<256x128xbf16>
    %cst = arith.constant dense<0.000000e+00> : vector<512x128xf32>
    %6 = tpu.matmul %4, %5, %cst {dimension_numbers = #tpu.dot_dimension_numbers<[1], [0], [0], [1], [0, 0, 1, 1], [], []>} : vector<512x256xbf16>, vector<256x128xbf16>, vector<512x128xf32> -> vector<512x128xf32>
    %7 = arith.addf %3, %6 : vector<512x128xf32>
    %c0_6 = arith.constant 0 : index
    %c0_7 = arith.constant 0 : index
    %8 = vector.load %arg7[%c0_6, %c0_7] : memref<512x128xf32, #tpu.memory_space<vmem>>, vector<512x128xf32>
    tpu.vector_store %arg7[%c0_6, %c0_7], %7 {strides = array<i32>} : memref<512x128xf32, #tpu.memory_space<vmem>>, vector<512x128xf32>,
    %c0_i32_8 = arith.constant 0 : i32
    %9 = arith.cmpi eq, %arg2, %c0_i32_8 : i32
    %10 = arith.extui %9 : i1 to i32
    %c0_i32_9 = arith.constant 0 : i32
    %11 = arith.cmpi ne, %10, %c0_i32_9 : i32
    scf.if %11 {
      %c0_10 = arith.constant 0 : index
      %c0_11 = arith.constant 0 : index
      %12 = vector.load %arg7[%c0_10, %c0_11] : memref<512x128xf32, #tpu.memory_space<vmem>>, vector<512x128xf32>
      %c0_12 = arith.constant 0 : index
      %c0_13 = arith.constant 0 : index
      %13 = vector.load %arg5[%c0_12, %c0_13] : memref<1x128xf32, #tpu.memory_space<vmem>>, vector<1x128xf32>
      %14 = vector.broadcast %13 : vector<1x128xf32> to vector<512x128xf32>
      %15 = arith.addf %12, %14 : vector<512x128xf32>
      %cst_14 = arith.constant 0.000000e+00 : f32
      %16 = vector.broadcast %cst_14 : f32 to vector<512x128xf32>
      %17 = arith.maximumf %15, %16 : vector<512x128xf32>
      %18 = arith.truncf %17 : vector<512x128xf32> to vector<512x128xbf16>
      %c0_15 = arith.constant 0 : index
      %c0_16 = arith.constant 0 : index
      %19 = vector.load %arg6[%c0_15, %c0_16] : memref<512x128xbf16, #tpu.memory_space<vmem>>, vector<512x128xbf16>
      tpu.vector_store %arg6[%c0_15, %c0_16], %18 {strides = array<i32>} : memref<512x128xbf16, #tpu.memory_space<vmem>>, vector<512x128xbf16>,
    } else {
    }
    return
  }
  func.func @transform_0(%arg0: i32, %arg1: i32, %arg2: i32) -> (i32, i32) {
    %c0_i32 = arith.constant 0 : i32
    return %arg0, %arg2 : i32, i32
  }
  func.func @transform_1(%arg0: i32, %arg1: i32, %arg2: i32) -> (i32, i32) {
    %c0_i32 = arith.constant 0 : i32
    return %arg2, %arg1 : i32, i32
  }
  func.func @transform_2(%arg0: i32, %arg1: i32, %arg2: i32) -> (i32, i32) {
    %c0_i32 = arith.constant 0 : i32
    %c0_i32_0 = arith.constant 0 : i32
    return %c0_i32, %arg1 : i32, i32
  }
  func.func @transform_3(%arg0: i32, %arg1: i32, %arg2: i32) -> (i32, i32) {
    %c0_i32 = arith.constant 0 : i32
    return %arg0, %arg1 : i32, i32
  }
}

</mosaic_0001>

<llo_original>
// kernel: _conv_bn_impl.1
$region0: #{_conv_bn_impl.1}
  #allocation0 [shape = 'u32[]', space=smem, size = 0x4, offset = 0x4, fixed_abs, tag = 'smem constant byte address 0x4 - core index']
  #allocation1 [shape = 'u32[144,128]{1,0:T(1,128)}', space=vmem, size = 0x12000, scoped, tag = 'internal scratch']
  #allocation2 [shape = 'f32[512,128]{1,0:T(8,128)}', space=vmem, size = 0x40000, scoped, tag = 'scratch operand']
  %s0 = inlined_call_operand.vmem [shape: bf16[512,256], index: 0, kind: input, shape index: {}]
  %s1 = inlined_call_operand.vmem [shape: bf16[256,128], index: 1, kind: input, shape index: {}]
  %s2 = inlined_call_operand.vmem [shape: f32[1,128], index: 2, kind: input, shape index: {}]
  %s3 = inlined_call_operand.hbm [shape: bf16[512,128], index: 3, kind: output, shape index: {}]
  %s4 = sld [smem:[#allocation0]]
  $region30: #{_conv_bn_impl.1} parent=0
    _
  %s6 = ssub.s32 1, %s4
  %s7 = scalar_select 0, %s6, %s4
  $region1: #{_conv_bn_impl.1} parent=0
    #allocation3 [shape = 'u8[131072]{0}', space=vmem, size = 0x20000, scoped, tag = 'output window, operand 0, single buffered']
    #allocation4 [shape = 's32[1]{0}', space=sflag, size = 0x4, scoped, tag = 'scoped memory for _conv_bn_impl.1']
    %8 = vsyncpa [#allocation4], 0
    // Predicated region
    $region2: #{_conv_bn_impl.1} parent=1 // pred_check
      _
    $region3: #{_conv_bn_impl.1} parent=1 // pred_check_branch
      %10 = sbr.rel (0) target = $region5
    $region4: #{_conv_bn_impl.1} parent=1 // pred_region
      _
    $region5: #{_conv_bn_impl.1} parent=1 // pred_fallthru
      _
    // Predicated region
    $region6: #{_conv_bn_impl.1} parent=1 // pred_check
      _
    $region7: #{_conv_bn_impl.1} parent=1 // pred_check_branch
      %12 = sbr.rel (0) target = $region9
    $region8: #{_conv_bn_impl.1} parent=1 // pred_region
      _
    $region9: #{_conv_bn_impl.1} parent=1 // pred_fallthru
      _
    // Predicated region
    $region10: #{_conv_bn_impl.1} parent=1 // pred_check
      _
    $region11: #{_conv_bn_impl.1} parent=1 // pred_check_branch
      %14 = sbr.rel (0) target = $region13
    $region12: #{_conv_bn_impl.1} parent=1 // pred_region
      _
    $region13: #{_conv_bn_impl.1} parent=1 // pred_fallthru
      _
    %p16 = scmp.eq.s32.totalorder 0, 0
    // Predicated region
    $region14: #{_conv_bn_impl.1} parent=1 // pred_check
      %p17 = pneg %p16
    $region15: #{_conv_bn_impl.1} parent=1 // pred_check_branch
      %19 = sbr.rel (%p17) target = $region17
    $region16: #{_conv_bn_impl.1} parent=1 // pred_region
      %20 = vst [vmem:[#allocation2] sm:$0xff] 0.0
      %21 = vst [vmem:[#allocation2 + $0x8] sm:$0xff] 0.0
      %22 = vst [vmem:[#allocation2 + $0x10] sm:$0xff] 0.0
      %23 = vst [vmem:[#allocation2 + $0x18] sm:$0xff] 0.0
      %24 = vst [vmem:[#allocation2 + $0x20] sm:$0xff] 0.0
      %25 = vst [vmem:[#allocation2 + $0x28] sm:$0xff] 0.0
      %26 = vst [vmem:[#allocation2 + $0x30] sm:$0xff] 0.0
      %27 = vst [vmem:[#allocation2 + $0x38] sm:$0xff] 0.0
      %28 = vst [vmem:[#allocation2 + $0x40] sm:$0xff] 0.0
      %29 = vst [vmem:[#allocation2 + $0x48] sm:$0xff] 0.0
      %30 = vst [vmem:[#allocation2 + $0x50] sm:$0xff] 0.0
      %31 = vst [vmem:[#allocation2 + $0x58] sm:$0xff] 0.0
      %32 = vst [vmem:[#allocation2 + $0x60] sm:$0xff] 0.0
      %33 = vst [vmem:[#allocation2 + $0x68] sm:$0xff] 0.0
      %34 = vst [vmem:[#allocation2 + $0x70] sm:$0xff] 0.0
      %35 = vst [vmem:[#allocation2 + $0x78] sm:$0xff] 0.0
      %36 = vst [vmem:[#allocation2 + $0x80] sm:$0xff] 0.0
      %37 = vst [vmem:[#allocation2 + $0x88] sm:$0xff] 0.0
      %38 = vst [vmem:[#allocation2 + $0x90] sm:$0xff] 0.0
      %39 = vst [vmem:[#allocation2 + $0x98] sm:$0xff] 0.0
      %40 = vst [vmem:[#allocation2 + $0xa0] sm:$0xff] 0.0
      %41 = vst [vmem:[#allocation2 + $0xa8] sm:$0xff] 0.0
      %42 = vst [vmem:[#allocation2 + $0xb0] sm:$0xff] 0.0
      %43 = vst [vmem:[#allocation2 + $0xb8] sm:$0xff] 0.0
      %44 = vst [vmem:[#allocation2 + $0xc0] sm:$0xff] 0.0
      %45 = vst [vmem:[#allocation2 + $0xc8] sm:$0xff] 0.0
      %46 = vst [vmem:[#allocation2 + $0xd0] sm:$0xff] 0.0
      %47 = vst [vmem:[#allocation2 + $0xd8] sm:$0xff] 0.0
      %48 = vst [vmem:[#allocation2 + $0xe0] sm:$0xff] 0.0
      %49 = vst [vmem:[#allocation2 + $0xe8] sm:$0xff] 0.0
      %50 = vst [vmem:[#allocation2 + $0xf0] sm:$0xff] 0.0
      %51 = vst [vmem:[#allocation2 + $0xf8] sm:$0xff] 0.0
      %52 = vst [vmem:[#allocation2 + $0x100] sm:$0xff] 0.0
      %53 = vst [vmem:[#allocation2 + $0x108] sm:$0xff] 0.0
      %54 = vst [vmem:[#allocation2 + $0x110] sm:$0xff] 0.0
      %55 = vst [vmem:[#allocation2 + $0x118] sm:$0xff] 0.0
      %56 = vst [vmem:[#allocation2 + $0x120] sm:$0xff] 0.0
      %57 = vst [vmem:[#allocation2 + $0x128] sm:$0xff] 0.0
      %58 = vst [vmem:[#allocation2 + $0x130] sm:$0xff] 0.0
      %59 = vst [vmem:[#allocation2 + $0x138] sm:$0xff] 0.0
      %60 = vst [vmem:[#allocation2 + $0x140] sm:$0xff] 0.0
      %61 = vst [vmem:[#allocation2 + $0x148] sm:$0xff] 0.0
      %62 = vst [vmem:[#allocation2 + $0x150] sm:$0xff] 0.0
      %63 = vst [vmem:[#allocation2 + $0x158] sm:$0xff] 0.0
      %64 = vst [vmem:[#allocation2 + $0x160] sm:$0xff] 0.0
      %65 = vst [vmem:[#allocation2 + $0x168] sm:$0xff] 0.0
      %66 = vst [vmem:[#allocation2 + $0x170] sm:$0xff] 0.0
      %67 = vst [vmem:[#allocation2 + $0x178] sm:$0xff] 0.0
      %68 = vst [vmem:[#allocation2 + $0x180] sm:$0xff] 0.0
      %69 = vst [vmem:[#allocation2 + $0x188] sm:$0xff] 0.0
      %70 = vst [vmem:[#allocation2 + $0x190] sm:$0xff] 0.0
      %71 = vst [vmem:[#allocation2 + $0x198] sm:$0xff] 0.0
      %72 = vst [vmem:[#allocation2 + $0x1a0] sm:$0xff] 0.0
      %73 = vst [vmem:[#allocation2 + $0x1a8] sm:$0xff] 0.0
      %74 = vst [vmem:[#allocation2 + $0x1b0] sm:$0xff] 0.0
      %75 = vst [vmem:[#allocation2 + $0x1b8] sm:$0xff] 0.0
      %76 = vst [vmem:[#allocation2 + $0x1c0] sm:$0xff] 0.0
      %77 = vst [vmem:[#allocation2 + $0x1c8] sm:$0xff] 0.0
      %78 = vst [vmem:[#allocation2 + $0x1d0] sm:$0xff] 0.0
      %79 = vst [vmem:[#allocation2 + $0x1d8] sm:$0xff] 0.0
      %80 = vst [vmem:[#allocation2 + $0x1e0] sm:$0xff] 0.0
      %81 = vst [vmem:[#allocation2 + $0x1e8] sm:$0xff] 0.0
      %82 = vst [vmem:[#allocation2 + $0x1f0] sm:$0xff] 0.0
      %83 = vst [vmem:[#allocation2 + $0x1f8] sm:$0xff] 0.0
    $region17: #{_conv_bn_impl.1} parent=1 // pred_fallthru
      _
    %v84 = vld [vmem:[#allocation2] sm:$0xff]
    %v85 = vld [vmem:[#allocation2 + $0x8] sm:$0xff]
    %v86 = vld [vmem:[#allocation2 + $0x10] sm:$0xff]
    %v87 = vld [vmem:[#allocation2 + $0x18] sm:$0xff]
    %v88 = vld [vmem:[#allocation2 + $0x20] sm:$0xff]
    %v89 = vld [vmem:[#allocation2 + $0x28] sm:$0xff]
    %v90 = vld [vmem:[#allocation2 + $0x30] sm:$0xff]
    %v91 = vld [vmem:[#allocation2 + $0x38] sm:$0xff]
    %v92 = vld [vmem:[#allocation2 + $0x40] sm:$0xff]
    %v93 = vld [vmem:[#allocation2 + $0x48] sm:$0xff]
    %v94 = vld [vmem:[#allocation2 + $0x50] sm:$0xff]
    %v95 = vld [vmem:[#allocation2 + $0x58] sm:$0xff]
    %v96 = vld [vmem:[#allocation2 + $0x60] sm:$0xff]
    %v97 = vld [vmem:[#allocation2 + $0x68] sm:$0xff]
    %v98 = vld [vmem:[#allocation2 + $0x70] sm:$0xff]
    %v99 = vld [vmem:[#allocation2 + $0x78] sm:$0xff]
    %v100 = vld [vmem:[#allocation2 + $0x80] sm:$0xff]
    %v101 = vld [vmem:[#allocation2 + $0x88] sm:$0xff]
    %v102 = vld [vmem:[#allocation2 + $0x90] sm:$0xff]
    %v103 = vld [vmem:[#allocation2 + $0x98] sm:$0xff]
    %v104 = vld [vmem:[#allocation2 + $0xa0] sm:$0xff]
    %v105 = vld [vmem:[#allocation2 + $0xa8] sm:$0xff]
    %v106 = vld [vmem:[#allocation2 + $0xb0] sm:$0xff]
    %v107 = vld [vmem:[#allocation2 + $0xb8] sm:$0xff]
    %v108 = vld [vmem:[#allocation2 + $0xc0] sm:$0xff]
    %v109 = vld [vmem:[#allocation2 + $0xc8] sm:$0xff]
    %v110 = vld [vmem:[#allocation2 + $0xd0] sm:$0xff]
    %v111 = vld [vmem:[#allocation2 + $0xd8] sm:$0xff]
    %v112 = vld [vmem:[#allocation2 + $0xe0] sm:$0xff]
    %v113 = vld [vmem:[#allocation2 + $0xe8] sm:$0xff]
    %v114 = vld [vmem:[#allocation2 + $0xf0] sm:$0xff]
    %v115 = vld [vmem:[#allocation2 + $0xf8] sm:$0xff]
    %v116 = vld [vmem:[#allocation2 + $0x100] sm:$0xff]
    %v117 = vld [vmem:[#allocation2 + $0x108] sm:$0xff]
    %v118 = vld [vmem:[#allocation2 + $0x110] sm:$0xff]
    %v119 = vld [vmem:[#allocation2 + $0x118] sm:$0xff]
    %v120 = vld [vmem:[#allocation2 + $0x120] sm:$0xff]
    %v121 = vld [vmem:[#allocation2 + $0x128] sm:$0xff]
    %v122 = vld [vmem:[#allocation2 + $0x130] sm:$0xff]
    %v123 = vld [vmem:[#allocation2 + $0x138] sm:$0xff]
    %v124 = vld [vmem:[#allocation2 + $0x140] sm:$0xff]
    %v125 = vld [vmem:[#allocation2 + $0x148] sm:$0xff]
    %v126 = vld [vmem:[#allocation2 + $0x150] sm:$0xff]
    %v127 = vld [vmem:[#allocation2 + $0x158] sm:$0xff]
    %v128 = vld [vmem:[#allocation2 + $0x160] sm:$0xff]
    %v129 = vld [vmem:[#allocation2 + $0x168] sm:$0xff]
    %v130 = vld [vmem:[#allocation2 + $0x170] sm:$0xff]
    %v131 = vld [vmem:[#allocation2 + $0x178] sm:$0xff]
    %v132 = vld [vmem:[#allocation2 + $0x180] sm:$0xff]
    %v133 = vld [vmem:[#allocation2 + $0x188] sm:$0xff]
    %v134 = vld [vmem:[#allocation2 + $0x190] sm:$0xff]
    %v135 = vld [vmem:[#allocation2 + $0x198] sm:$0xff]
    %v136 = vld [vmem:[#allocation2 + $0x1a0] sm:$0xff]
    %v137 = vld [vmem:[#allocation2 + $0x1a8] sm:$0xff]
    %v138 = vld [vmem:[#allocation2 + $0x1b0] sm:$0xff]
    %v139 = vld [vmem:[#allocation2 + $0x1b8] sm:$0xff]
    %v140 = vld [vmem:[#allocation2 + $0x1c0] sm:$0xff]
    %v141 = vld [vmem:[#allocation2 + $0x1c8] sm:$0xff]
    %v142 = vld [vmem:[#allocation2 + $0x1d0] sm:$0xff]
    %v143 = vld [vmem:[#allocation2 + $0x1d8] sm:$0xff]
    %v144 = vld [vmem:[#allocation2 + $0x1e0] sm:$0xff]
    %v145 = vld [vmem:[#allocation2 + $0x1e8] sm:$0xff]
    %v146 = vld [vmem:[#allocation2 + $0x1f0] sm:$0xff]
    %v147 = vld [vmem:[#allocation2 + $0x1f8] sm:$0xff]
    %v148 = vld [vmem:[%s0] sm:$0xff]
    %v149 = vld [vmem:[%s0 + $0x8] sm:$0xff]
    %v150 = vld [vmem:[%s0 + $0x10] sm:$0xff]
    %v151 = vld [vmem:[%s0 + $0x18] sm:$0xff]
    %v152 = vld [vmem:[%s0 + $0x20] sm:$0xff]
    %v153 = vld [vmem:[%s0 + $0x28] sm:$0xff]
    %v154 = vld [vmem:[%s0 + $0x30] sm:$0xff]
    %v155 = vld [vmem:[%s0 + $0x38] sm:$0xff]
    %v156 = vld [vmem:[%s0 + $0x40] sm:$0xff]
    %v157 = vld [vmem:[%s0 + $0x48] sm:$0xff]
    %v158 = vld [vmem:[%s0 + $0x50] sm:$0xff]
    %v159 = vld [vmem:[%s0 + $0x58] sm:$0xff]
    %v160 = vld [vmem:[%s0 + $0x60] sm:$0xff]
    %v161 = vld [vmem:[%s0 + $0x68] sm:$0xff]
    %v162 = vld [vmem:[%s0 + $0x70] sm:$0xff]
    %v163 = vld [vmem:[%s0 + $0x78] sm:$0xff]
    %v164 = vld [vmem:[%s0 + $0x80] sm:$0xff]
    %v165 = vld [vmem:[%s0 + $0x88] sm:$0xff]
    %v166 = vld [vmem:[%s0 + $0x90] sm:$0xff]
    %v167 = vld [vmem:[%s0 + $0x98] sm:$0xff]
    %v168 = vld [vmem:[%s0 + $0xa0] sm:$0xff]
    %v169 = vld [vmem:[%s0 + $0xa8] sm:$0xff]
    %v170 = vld [vmem:[%s0 + $0xb0] sm:$0xff]
    %v171 = vld [vmem:[%s0 + $0xb8] sm:$0xff]
    %v172 = vld [vmem:[%s0 + $0xc0] sm:$0xff]
    %v173 = vld [vmem:[%s0 + $0xc8] sm:$0xff]
    %v174 = vld [vmem:[%s0 + $0xd0] sm:$0xff]
    %v175 = vld [vmem:[%s0 + $0xd8] sm:$0xff]
    %v176 = vld [vmem:[%s0 + $0xe0] sm:$0xff]
    %v177 = vld [vmem:[%s0 + $0xe8] sm:$0xff]
    %v178 = vld [vmem:[%s0 + $0xf0] sm:$0xff]
    %v179 = vld [vmem:[%s0 + $0xf8] sm:$0xff]
    %v180 = vld [vmem:[%s0 + $0x100] sm:$0xff]
    %v181 = vld [vmem:[%s0 + $0x108] sm:$0xff]
    %v182 = vld [vmem:[%s0 + $0x110] sm:$0xff]
    %v183 = vld [vmem:[%s0 + $0x118] sm:$0xff]
    %v184 = vld [vmem:[%s0 + $0x120] sm:$0xff]
    %v185 = vld [vmem:[%s0 + $0x128] sm:$0xff]
    %v186 = vld [vmem:[%s0 + $0x130] sm:$0xff]
    %v187 = vld [vmem:[%s0 + $0x138] sm:$0xff]
    %v188 = vld [vmem:[%s0 + $0x140] sm:$0xff]
    %v189 = vld [vmem:[%s0 + $0x148] sm:$0xff]
    %v190 = vld [vmem:[%s0 + $0x150] sm:$0xff]
    %v191 = vld [vmem:[%s0 + $0x158] sm:$0xff]
    %v192 = vld [vmem:[%s0 + $0x160] sm:$0xff]
    %v193 = vld [vmem:[%s0 + $0x168] sm:$0xff]
    %v194 = vld [vmem:[%s0 + $0x170] sm:$0xff]
    %v195 = vld [vmem:[%s0 + $0x178] sm:$0xff]
    %v196 = vld [vmem:[%s0 + $0x180] sm:$0xff]
    %v197 = vld [vmem:[%s0 + $0x188] sm:$0xff]
    %v198 = vld [vmem:[%s0 + $0x190] sm:$0xff]
    %v199 = vld [vmem:[%s0 + $0x198] sm:$0xff]
    %v200 = vld [vmem:[%s0 + $0x1a0] sm:$0xff]
    %v201 = vld [vmem:[%s0 + $0x1a8] sm:$0xff]
    %v202 = vld [vmem:[%s0 + $0x1b0] sm:$0xff]
    %v203 = vld [vmem:[%s0 + $0x1b8] sm:$0xff]
    %v204 = vld [vmem:[%s0 + $0x1c0] sm:$0xff]
    %v205 = vld [vmem:[%s0 + $0x1c8] sm:$0xff]
    %v206 = vld [vmem:[%s0 + $0x1d0] sm:$0xff]
    %v207 = vld [vmem:[%s0 + $0x1d8] sm:$0xff]
    %v208 = vld [vmem:[%s0 + $0x1e0] sm:$0xff]
    %v209 = vld [vmem:[%s0 + $0x1e8] sm:$0xff]
    %v210 = vld [vmem:[%s0 + $0x1f0] sm:$0xff]
    %v211 = vld [vmem:[%s0 + $0x1f8] sm:$0xff]
    %v212 = vld [vmem:[%s1] sm:$0xf]
    %v213 = vld [vmem:[%s1 + $0x4] sm:$0xf]
    %v214 = vld [vmem:[%s1 + $0x8] sm:$0xf]
    %v215 = vld [vmem:[%s1 + $0xc] sm:$0xf]
    %v216 = vld [vmem:[%s1 + $0x10] sm:$0xf]
    %v217 = vld [vmem:[%s1 + $0x14] sm:$0xf]
    %v218 = vld [vmem:[%s1 + $0x18] sm:$0xf]
    %v219 = vld [vmem:[%s1 + $0x1c] sm:$0xf]
    %v220 = vld [vmem:[%s1 + $0x20] sm:$0xf]
    %v221 = vld [vmem:[%s1 + $0x24] sm:$0xf]
    %v222 = vld [vmem:[%s1 + $0x28] sm:$0xf]
    %v223 = vld [vmem:[%s1 + $0x2c] sm:$0xf]
    %v224 = vld [vmem:[%s1 + $0x30] sm:$0xf]
    %v225 = vld [vmem:[%s1 + $0x34] sm:$0xf]
    %v226 = vld [vmem:[%s1 + $0x38] sm:$0xf]
    %v227 = vld [vmem:[%s1 + $0x3c] sm:$0xf]
    %v228 = vld [vmem:[%s1 + $0x40] sm:$0xf]
    %v229 = vld [vmem:[%s1 + $0x44] sm:$0xf]
    %v230 = vld [vmem:[%s1 + $0x48] sm:$0xf]
    %v231 = vld [vmem:[%s1 + $0x4c] sm:$0xf]
    %v232 = vld [vmem:[%s1 + $0x50] sm:$0xf]
    %v233 = vld [vmem:[%s1 + $0x54] sm:$0xf]
    %v234 = vld [vmem:[%s1 + $0x58] sm:$0xf]
    %v235 = vld [vmem:[%s1 + $0x5c] sm:$0xf]
    %v236 = vld [vmem:[%s1 + $0x60] sm:$0xf]
    %v237 = vld [vmem:[%s1 + $0x64] sm:$0xf]
    %v238 = vld [vmem:[%s1 + $0x68] sm:$0xf]
    %v239 = vld [vmem:[%s1 + $0x6c] sm:$0xf]
    %v240 = vld [vmem:[%s1 + $0x70] sm:$0xf]
    %v241 = vld [vmem:[%s1 + $0x74] sm:$0xf]
    %v242 = vld [vmem:[%s1 + $0x78] sm:$0xf]
    %v243 = vld [vmem:[%s1 + $0x7c] sm:$0xf]
    %v308 = vunpack.c.l.b16 %v148
    %v309 = vunpack.c.h.b16 %v148
    %v310 = vunpack.c.l.b16 %v149
    %v311 = vunpack.c.h.b16 %v149
    %v312 = vunpack.c.l.b16 %v150
    %v313 = vunpack.c.h.b16 %v150
    %v314 = vunpack.c.l.b16 %v151
    %v315 = vunpack.c.h.b16 %v151
    %v316 = vunpack.c.l.b16 %v152
    %v317 = vunpack.c.h.b16 %v152
    %v318 = vunpack.c.l.b16 %v153
    %v319 = vunpack.c.h.b16 %v153
    %v320 = vunpack.c.l.b16 %v154
    %v321 = vunpack.c.h.b16 %v154
    %v322 = vunpack.c.l.b16 %v155
    %v323 = vunpack.c.h.b16 %v155
    %v324 = vunpack.c.l.b16 %v156
    %v325 = vunpack.c.h.b16 %v156
    %v326 = vunpack.c.l.b16 %v157
    %v327 = vunpack.c.h.b16 %v157
    %v328 = vunpack.c.l.b16 %v158
    %v329 = vunpack.c.h.b16 %v158
    %v330 = vunpack.c.l.b16 %v159
    %v331 = vunpack.c.h.b16 %v159
    %v332 = vunpack.c.l.b16 %v160
    %v333 = vunpack.c.h.b16 %v160
    %v334 = vunpack.c.l.b16 %v161
    %v335 = vunpack.c.h.b16 %v161
    %v336 = vunpack.c.l.b16 %v162
    %v337 = vunpack.c.h.b16 %v162
    %v338 = vunpack.c.l.b16 %v163
    %v339 = vunpack.c.h.b16 %v163
    %v340 = vunpack.c.l.b16 %v164
    %v341 = vunpack.c.h.b16 %v164
    %v342 = vunpack.c.l.b16 %v165
    %v343 = vunpack.c.h.b16 %v165
    %v344 = vunpack.c.l.b16 %v166
    %v345 = vunpack.c.h.b16 %v166
    %v346 = vunpack.c.l.b16 %v167
    %v347 = vunpack.c.h.b16 %v167
    %v348 = vunpack.c.l.b16 %v168
    %v349 = vunpack.c.h.b16 %v168
    %v350 = vunpack.c.l.b16 %v169
    %v351 = vunpack.c.h.b16 %v169
    %v352 = vunpack.c.l.b16 %v170
    %v353 = vunpack.c.h.b16 %v170
    %v354 = vunpack.c.l.b16 %v171
    %v355 = vunpack.c.h.b16 %v171
    %v356 = vunpack.c.l.b16 %v172
    %v357 = vunpack.c.h.b16 %v172
    %v358 = vunpack.c.l.b16 %v173
    %v359 = vunpack.c.h.b16 %v173
    %v360 = vunpack.c.l.b16 %v174
    %v361 = vunpack.c.h.b16 %v174
    %v362 = vunpack.c.l.b16 %v175
    %v363 = vunpack.c.h.b16 %v175
    %v364 = vunpack.c.l.b16 %v176
    %v365 = vunpack.c.h.b16 %v176
    %v366 = vunpack.c.l.b16 %v177
    %v367 = vunpack.c.h.b16 %v177
    %v368 = vunpack.c.l.b16 %v178
    %v369 = vunpack.c.h.b16 %v178
    %v370 = vunpack.c.l.b16 %v179
    %v371 = vunpack.c.h.b16 %v179
    %v372 = vunpack.c.l.b16 %v180
    %v373 = vunpack.c.h.b16 %v180
    %v374 = vunpack.c.l.b16 %v181
    %v375 = vunpack.c.h.b16 %v181
    %v376 = vunpack.c.l.b16 %v182
    %v377 = vunpack.c.h.b16 %v182
    %v378 = vunpack.c.l.b16 %v183
    %v379 = vunpack.c.h.b16 %v183
    %v380 = vunpack.c.l.b16 %v184
    %v381 = vunpack.c.h.b16 %v184
    %v382 = vunpack.c.l.b16 %v185
    %v383 = vunpack.c.h.b16 %v185
    %v384 = vunpack.c.l.b16 %v186
    %v385 = vunpack.c.h.b16 %v186
    %v386 = vunpack.c.l.b16 %v187
    %v387 = vunpack.c.h.b16 %v187
    %v388 = vunpack.c.l.b16 %v188
    %v389 = vunpack.c.h.b16 %v188
    %v390 = vunpack.c.l.b16 %v189
    %v391 = vunpack.c.h.b16 %v189
    %v392 = vunpack.c.l.b16 %v190
    %v393 = vunpack.c.h.b16 %v190
    %v394 = vunpack.c.l.b16 %v191
    %v395 = vunpack.c.h.b16 %v191
    %v396 = vunpack.c.l.b16 %v192
    %v397 = vunpack.c.h.b16 %v192
    %v398 = vunpack.c.l.b16 %v193
    %v399 = vunpack.c.h.b16 %v193
    %v400 = vunpack.c.l.b16 %v194
    %v401 = vunpack.c.h.b16 %v194
    %v402 = vunpack.c.l.b16 %v195
    %v403 = vunpack.c.h.b16 %v195
    %v404 = vunpack.c.l.b16 %v196
    %v405 = vunpack.c.h.b16 %v196
    %v406 = vunpack.c.l.b16 %v197
    %v407 = vunpack.c.h.b16 %v197
    %v408 = vunpack.c.l.b16 %v198
    %v409 = vunpack.c.h.b16 %v198
    %v410 = vunpack.c.l.b16 %v199
    %v411 = vunpack.c.h.b16 %v199
    %v412 = vunpack.c.l.b16 %v200
    %v413 = vunpack.c.h.b16 %v200
    %v414 = vunpack.c.l.b16 %v201
    %v415 = vunpack.c.h.b16 %v201
    %v416 = vunpack.c.l.b16 %v202
    %v417 = vunpack.c.h.b16 %v202
    %v418 = vunpack.c.l.b16 %v203
    %v419 = vunpack.c.h.b16 %v203
    %v420 = vunpack.c.l.b16 %v204
    %v421 = vunpack.c.h.b16 %v204
    %v422 = vunpack.c.l.b16 %v205
    %v423 = vunpack.c.h.b16 %v205
    %v424 = vunpack.c.l.b16 %v206
    %v425 = vunpack.c.h.b16 %v206
    %v426 = vunpack.c.l.b16 %v207
    %v427 = vunpack.c.h.b16 %v207
    %v428 = vunpack.c.l.b16 %v208
    %v429 = vunpack.c.h.b16 %v208
    %v430 = vunpack.c.l.b16 %v209
    %v431 = vunpack.c.h.b16 %v209
    %v432 = vunpack.c.l.b16 %v210
    %v433 = vunpack.c.h.b16 %v210
    %v434 = vunpack.c.l.b16 %v211
    %v435 = vunpack.c.h.b16 %v211
    %v436 = vpack.c.b16 %v310, %v308
    %v437 = vpack.c.b16 %v311, %v309
    %v438 = vpack.c.b16 %v314, %v312
    %v439 = vpack.c.b16 %v315, %v313
    %v440 = vpack.c.b16 %v318, %v316
    %v441 = vpack.c.b16 %v319, %v317
    %v442 = vpack.c.b16 %v322, %v320
    %v443 = vpack.c.b16 %v323, %v321
    %v444 = vpack.c.b16 %v326, %v324
    %v445 = vpack.c.b16 %v327, %v325
    %v446 = vpack.c.b16 %v330, %v328
    %v447 = vpack.c.b16 %v331, %v329
    %v448 = vpack.c.b16 %v334, %v332
    %v449 = vpack.c.b16 %v335, %v333
    %v450 = vpack.c.b16 %v338, %v336
    %v451 = vpack.c.b16 %v339, %v337
    %v452 = vpack.c.b16 %v342, %v340
    %v453 = vpack.c.b16 %v343, %v341
    %v454 = vpack.c.b16 %v346, %v344
    %v455 = vpack.c.b16 %v347, %v345
    %v456 = vpack.c.b16 %v350, %v348
    %v457 = vpack.c.b16 %v351, %v349
    %v458 = vpack.c.b16 %v354, %v352
    %v459 = vpack.c.b16 %v355, %v353
    %v460 = vpack.c.b16 %v358, %v356
    %v461 = vpack.c.b16 %v359, %v357
    %v462 = vpack.c.b16 %v362, %v360
    %v463 = vpack.c.b16 %v363, %v361
    %v464 = vpack.c.b16 %v366, %v364
    %v465 = vpack.c.b16 %v367, %v365
    %v466 = vpack.c.b16 %v370, %v368
    %v467 = vpack.c.b16 %v371, %v369
    %v468 = vpack.c.b16 %v374, %v372
    %v469 = vpack.c.b16 %v375, %v373
    %v470 = vpack.c.b16 %v378, %v376
    %v471 = vpack.c.b16 %v379, %v377
    %v472 = vpack.c.b16 %v382, %v380
    %v473 = vpack.c.b16 %v383, %v381
    %v474 = vpack.c.b16 %v386, %v384
    %v475 = vpack.c.b16 %v387, %v385
    %v476 = vpack.c.b16 %v390, %v388
    %v477 = vpack.c.b16 %v391, %v389
    %v478 = vpack.c.b16 %v394, %v392
    %v479 = vpack.c.b16 %v395, %v393
    %v480 = vpack.c.b16 %v398, %v396
    %v481 = vpack.c.b16 %v399, %v397
    %v482 = vpack.c.b16 %v402, %v400
    %v483 = vpack.c.b16 %v403, %v401
    %v484 = vpack.c.b16 %v406, %v404
    %v485 = vpack.c.b16 %v407, %v405
    %v486 = vpack.c.b16 %v410, %v408
    %v487 = vpack.c.b16 %v411, %v409
    %v488 = vpack.c.b16 %v414, %v412
    %v489 = vpack.c.b16 %v415, %v413
    %v490 = vpack.c.b16 %v418, %v416
    %v491 = vpack.c.b16 %v419, %v417
    %v492 = vpack.c.b16 %v422, %v420
    %v493 = vpack.c.b16 %v423, %v421
    %v494 = vpack.c.b16 %v426, %v424
    %v495 = vpack.c.b16 %v427, %v425
    %v496 = vpack.c.b16 %v430, %v428
    %v497 = vpack.c.b16 %v431, %v429
    %v498 = vpack.c.b16 %v434, %v432
    %v499 = vpack.c.b16 %v435, %v433
    %v596 = vunpack.c.l.b16 %v212
    %v597 = vunpack.c.l.b16 %v213
    %v598 = vunpack.c.l.b16 %v214
    %v599 = vunpack.c.l.b16 %v215
    %v600 = vunpack.c.l.b16 %v216
    %v601 = vunpack.c.l.b16 %v217
    %v602 = vunpack.c.l.b16 %v218
    %v603 = vunpack.c.l.b16 %v219
    %v604 = vunpack.c.l.b16 %v220
    %v605 = vunpack.c.l.b16 %v221
    %v606 = vunpack.c.l.b16 %v222
    %v607 = vunpack.c.l.b16 %v223
    %v608 = vunpack.c.l.b16 %v224
    %v609 = vunpack.c.l.b16 %v225
    %v610 = vunpack.c.l.b16 %v226
    %v611 = vunpack.c.l.b16 %v227
    %v612 = vunpack.c.l.b16 %v228
    %v613 = vunpack.c.l.b16 %v229
    %v614 = vunpack.c.l.b16 %v230
    %v615 = vunpack.c.l.b16 %v231
    %v616 = vunpack.c.l.b16 %v232
    %v617 = vunpack.c.l.b16 %v233
    %v618 = vunpack.c.l.b16 %v234
    %v619 = vunpack.c.l.b16 %v235
    %v620 = vunpack.c.l.b16 %v236
    %v621 = vunpack.c.l.b16 %v237
    %v622 = vunpack.c.l.b16 %v238
    %v623 = vunpack.c.l.b16 %v239
    %v624 = vunpack.c.l.b16 %v240
    %v625 = vunpack.c.l.b16 %v241
    %v626 = vunpack.c.l.b16 %v242
    %v627 = vunpack.c.l.b16 %v243
    %v628 = vpack.c.b16 %v597, %v596
    %v629 = vpack.c.b16 %v599, %v598
    %v630 = vpack.c.b16 %v601, %v600
    %v631 = vpack.c.b16 %v603, %v602
    %v632 = vpack.c.b16 %v605, %v604
    %v633 = vpack.c.b16 %v607, %v606
    %v634 = vpack.c.b16 %v609, %v608
    %v635 = vpack.c.b16 %v611, %v610
    %v636 = vpack.c.b16 %v613, %v612
    %v637 = vpack.c.b16 %v615, %v614
    %v638 = vpack.c.b16 %v617, %v616
    %v639 = vpack.c.b16 %v619, %v618
    %v640 = vpack.c.b16 %v621, %v620
    %v641 = vpack.c.b16 %v623, %v622
    %v642 = vpack.c.b16 %v625, %v624
    %v643 = vpack.c.b16 %v627, %v626
    %660 = vmatprep.subr.bf16.mxu0 0
    %661 = vmatpush1.bf16.msra.mxu0 %v635
    %662 = vmatprep.subr.bf16.mxu0 0
    %663 = vmatpush1.bf16.msra.mxu0 %v634
    %664 = vmatprep.subr.bf16.mxu0 0
    %665 = vmatpush1.bf16.msra.mxu0 %v633
    %666 = vmatprep.subr.bf16.mxu0 0
    %667 = vmatpush1.bf16.msra.mxu0 %v632
    %668 = vmatprep.subr.bf16.mxu0 0
    %669 = vmatpush1.bf16.msra.mxu0 %v631
    %670 = vmatprep.subr.bf16.mxu0 0
    %671 = vmatpush1.bf16.msra.mxu0 %v630
    %672 = vmatprep.subr.bf16.mxu0 0
    %673 = vmatpush1.bf16.msra.mxu0 %v629
    %674 = vmatprep.subr.bf16.mxu0 0
    %675 = vmatpush1.bf16.msra.mxu0 %v628
    %676 = vmatprep.subr.bf16.mxu0 0
    %677 = vmatpush2.bf16.msra.mxu0 %v643
    %678 = vmatprep.subr.bf16.mxu0 0
    %679 = vmatpush2.bf16.msra.mxu0 %v642
    %680 = vmatprep.subr.bf16.mxu0 0
    %681 = vmatpush2.bf16.msra.mxu0 %v641
    %682 = vmatprep.subr.bf16.mxu0 0
    %683 = vmatpush2.bf16.msra.mxu0 %v640
    %684 = vmatprep.subr.bf16.mxu0 0
    %685 = vmatpush2.bf16.msra.mxu0 %v639
    %686 = vmatprep.subr.bf16.mxu0 0
    %687 = vmatpush2.bf16.msra.mxu0 %v638
    %688 = vmatprep.subr.bf16.mxu0 0
    %689 = vmatpush2.bf16.msra.mxu0 %v637
    %690 = vmatprep.subr.bf16.mxu0 0
    %691 = vmatpush2.bf16.msra.mxu0 %v636
    %692 = vmatprep.mubr.bf16.mxu0 %v437
    %693 = vmatmul.mubr.bf16.gmra.mxu0 %v436
    %v694 = vpop.f32.mrf.mxu0
    %v695 = vadd.f32 0.0, %v694
    %v696 = vpop.f32.mrf.mxu0
    %v697 = vpop.f32.mrf.mxu0
    %v698 = vadd.f32 0.0, %v697
    %v699 = vpop.f32.mrf.mxu0
    %700 = vmatprep.mubr.bf16.mxu0 %v439
    %701 = vmatmul.mubr.bf16.gmra.mxu0 %v438
    %v702 = vpop.f32.mrf.mxu0
    %v703 = vadd.f32 0.0, %v702
    %v704 = vpop.f32.mrf.mxu0
    %v705 = vpop.f32.mrf.mxu0
    %v706 = vadd.f32 0.0, %v705
    %v707 = vpop.f32.mrf.mxu0
    %708 = vmatprep.mubr.bf16.mxu0 %v441
    %709 = vmatmul.mubr.bf16.gmra.mxu0 %v440
    %v710 = vpop.f32.mrf.mxu0
    %v711 = vadd.f32 0.0, %v710
    %v712 = vpop.f32.mrf.mxu0
    %v713 = vpop.f32.mrf.mxu0
    %v714 = vadd.f32 0.0, %v713
    %v715 = vpop.f32.mrf.mxu0
    %716 = vmatprep.mubr.bf16.mxu0 %v443
    %717 = vmatmul.mubr.bf16.gmra.mxu0 %v442
    %v718 = vpop.f32.mrf.mxu0
    %v719 = vadd.f32 0.0, %v718
    %v720 = vpop.f32.mrf.mxu0
    %v721 = vpop.f32.mrf.mxu0
    %v722 = vadd.f32 0.0, %v721
    %v723 = vpop.f32.mrf.mxu0
    %724 = vmatprep.mubr.bf16.mxu0 %v445
    %725 = vmatmul.mubr.bf16.gmra.mxu0 %v444
    %v726 = vpop.f32.mrf.mxu0
    %v727 = vadd.f32 0.0, %v726
    %v728 = vpop.f32.mrf.mxu0
    %v729 = vpop.f32.mrf.mxu0
    %v730 = vadd.f32 0.0, %v729
    %v731 = vpop.f32.mrf.mxu0
    %732 = vmatprep.mubr.bf16.mxu0 %v447
    %733 = vmatmul.mubr.bf16.gmra.mxu0 %v446
    %v734 = vpop.f32.mrf.mxu0
    %v735 = vadd.f32 0.0, %v734
    %v736 = vpop.f32.mrf.mxu0
    %v737 = vpop.f32.mrf.mxu0
    %v738 = vadd.f32 0.0, %v737
    %v739 = vpop.f32.mrf.mxu0
    %740 = vmatprep.mubr.bf16.mxu0 %v449
    %741 = vmatmul.mubr.bf16.gmra.mxu0 %v448
    %v742 = vpop.f32.mrf.mxu0
    %v743 = vadd.f32 0.0, %v742
    %v744 = vpop.f32.mrf.mxu0
    %v745 = vpop.f32.mrf.mxu0
    %v746 = vadd.f32 0.0, %v745
    %v747 = vpop.f32.mrf.mxu0
    %748 = vmatprep.mubr.bf16.mxu0 %v451
    %749 = vmatmul.mubr.bf16.gmra.mxu0 %v450
    %v750 = vpop.f32.mrf.mxu0
    %v751 = vadd.f32 0.0, %v750
    %v752 = vpop.f32.mrf.mxu0
    %v753 = vpop.f32.mrf.mxu0
    %v754 = vadd.f32 0.0, %v753
    %v755 = vpop.f32.mrf.mxu0
    %756 = vmatprep.mubr.bf16.mxu0 %v453
    %757 = vmatmul.mubr.bf16.gmra.mxu0 %v452
    %v758 = vpop.f32.mrf.mxu0
    %v759 = vadd.f32 0.0, %v758
    %v760 = vpop.f32.mrf.mxu0
    %v761 = vpop.f32.mrf.mxu0
    %v762 = vadd.f32 0.0, %v761
    %v763 = vpop.f32.mrf.mxu0
    %764 = vmatprep.mubr.bf16.mxu0 %v455
    %765 = vmatmul.mubr.bf16.gmra.mxu0 %v454
    %v766 = vpop.f32.mrf.mxu0
    %v767 = vadd.f32 0.0, %v766
    %v768 = vpop.f32.mrf.mxu0
    %v769 = vpop.f32.mrf.mxu0
    %v770 = vadd.f32 0.0, %v769
    %v771 = vpop.f32.mrf.mxu0
    %772 = vmatprep.mubr.bf16.mxu0 %v457
    %773 = vmatmul.mubr.bf16.gmra.mxu0 %v456
    %v774 = vpop.f32.mrf.mxu0
    %v775 = vadd.f32 0.0, %v774
    %v776 = vpop.f32.mrf.mxu0
    %v777 = vpop.f32.mrf.mxu0
    %v778 = vadd.f32 0.0, %v777
    %v779 = vpop.f32.mrf.mxu0
    %780 = vmatprep.mubr.bf16.mxu0 %v459
    %781 = vmatmul.mubr.bf16.gmra.mxu0 %v458
    %v782 = vpop.f32.mrf.mxu0
    %v783 = vadd.f32 0.0, %v782
    %v784 = vpop.f32.mrf.mxu0
    %v785 = vpop.f32.mrf.mxu0
    %v786 = vadd.f32 0.0, %v785
    %v787 = vpop.f32.mrf.mxu0
    %788 = vmatprep.mubr.bf16.mxu0 %v461
    %789 = vmatmul.mubr.bf16.gmra.mxu0 %v460
    %v790 = vpop.f32.mrf.mxu0
    %v791 = vadd.f32 0.0, %v790
    %v792 = vpop.f32.mrf.mxu0
    %v793 = vpop.f32.mrf.mxu0
    %v794 = vadd.f32 0.0, %v793
    %v795 = vpop.f32.mrf.mxu0
    %796 = vmatprep.mubr.bf16.mxu0 %v463
    %797 = vmatmul.mubr.bf16.gmra.mxu0 %v462
    %v798 = vpop.f32.mrf.mxu0
    %v799 = vadd.f32 0.0, %v798
    %v800 = vpop.f32.mrf.mxu0
    %v801 = vpop.f32.mrf.mxu0
    %v802 = vadd.f32 0.0, %v801
    %v803 = vpop.f32.mrf.mxu0
    %804 = vmatprep.mubr.bf16.mxu0 %v465
    %805 = vmatmul.mubr.bf16.gmra.mxu0 %v464
    %v806 = vpop.f32.mrf.mxu0
    %v807 = vadd.f32 0.0, %v806
    %v808 = vpop.f32.mrf.mxu0
    %v809 = vpop.f32.mrf.mxu0
    %v810 = vadd.f32 0.0, %v809
    %v811 = vpop.f32.mrf.mxu0
    %812 = vmatprep.mubr.bf16.mxu0 %v467
    %813 = vmatmul.mubr.bf16.gmra.mxu0 %v466
    %v814 = vpop.f32.mrf.mxu0
    %v815 = vadd.f32 0.0, %v814
    %v816 = vpop.f32.mrf.mxu0
    %v817 = vpop.f32.mrf.mxu0
    %v818 = vadd.f32 0.0, %v817
    %v819 = vpop.f32.mrf.mxu0
    %820 = vmatprep.mubr.bf16.mxu0 %v469
    %821 = vmatmul.mubr.bf16.gmra.mxu0 %v468
    %v822 = vpop.f32.mrf.mxu0
    %v823 = vadd.f32 0.0, %v822
    %v824 = vpop.f32.mrf.mxu0
    %v825 = vpop.f32.mrf.mxu0
    %v826 = vadd.f32 0.0, %v825
    %v827 = vpop.f32.mrf.mxu0
    %828 = vmatprep.mubr.bf16.mxu0 %v471
    %829 = vmatmul.mubr.bf16.gmra.mxu0 %v470
    %v830 = vpop.f32.mrf.mxu0
    %v831 = vadd.f32 0.0, %v830
    %v832 = vpop.f32.mrf.mxu0
    %v833 = vpop.f32.mrf.mxu0
    %v834 = vadd.f32 0.0, %v833
    %v835 = vpop.f32.mrf.mxu0
    %836 = vmatprep.mubr.bf16.mxu0 %v473
    %837 = vmatmul.mubr.bf16.gmra.mxu0 %v472
    %v838 = vpop.f32.mrf.mxu0
    %v839 = vadd.f32 0.0, %v838
    %v840 = vpop.f32.mrf.mxu0
    %v841 = vpop.f32.mrf.mxu0
    %v842 = vadd.f32 0.0, %v841
    %v843 = vpop.f32.mrf.mxu0
    %844 = vmatprep.mubr.bf16.mxu0 %v475
    %845 = vmatmul.mubr.bf16.gmra.mxu0 %v474
    %v846 = vpop.f32.mrf.mxu0
    %v847 = vadd.f32 0.0, %v846
    %v848 = vpop.f32.mrf.mxu0
    %v849 = vpop.f32.mrf.mxu0
    %v850 = vadd.f32 0.0, %v849
    %v851 = vpop.f32.mrf.mxu0
    %852 = vmatprep.mubr.bf16.mxu0 %v477
    %853 = vmatmul.mubr.bf16.gmra.mxu0 %v476
    %v854 = vpop.f32.mrf.mxu0
    %v855 = vadd.f32 0.0, %v854
    %v856 = vpop.f32.mrf.mxu0
    %v857 = vpop.f32.mrf.mxu0
    %v858 = vadd.f32 0.0, %v857
    %v859 = vpop.f32.mrf.mxu0
    %860 = vmatprep.mubr.bf16.mxu0 %v479
    %861 = vmatmul.mubr.bf16.gmra.mxu0 %v478
    %v862 = vpop.f32.mrf.mxu0
    %v863 = vadd.f32 0.0, %v862
    %v864 = vpop.f32.mrf.mxu0
    %v865 = vpop.f32.mrf.mxu0
    %v866 = vadd.f32 0.0, %v865
    %v867 = vpop.f32.mrf.mxu0
    %868 = vmatprep.mubr.bf16.mxu0 %v481
    %869 = vmatmul.mubr.bf16.gmra.mxu0 %v480
    %v870 = vpop.f32.mrf.mxu0
    %v871 = vadd.f32 0.0, %v870
    %v872 = vpop.f32.mrf.mxu0
    %v873 = vpop.f32.mrf.mxu0
    %v874 = vadd.f32 0.0, %v873
    %v875 = vpop.f32.mrf.mxu0
    %876 = vmatprep.mubr.bf16.mxu0 %v483
    %877 = vmatmul.mubr.bf16.gmra.mxu0 %v482
    %v878 = vpop.f32.mrf.mxu0
    %v879 = vadd.f32 0.0, %v878
    %v880 = vpop.f32.mrf.mxu0
    %v881 = vpop.f32.mrf.mxu0
    %v882 = vadd.f32 0.0, %v881
    %v883 = vpop.f32.mrf.mxu0
    %884 = vmatprep.mubr.bf16.mxu0 %v485
    %885 = vmatmul.mubr.bf16.gmra.mxu0 %v484
    %v886 = vpop.f32.mrf.mxu0
    %v887 = vadd.f32 0.0, %v886
    %v888 = vpop.f32.mrf.mxu0
    %v889 = vpop.f32.mrf.mxu0
    %v890 = vadd.f32 0.0, %v889
    %v891 = vpop.f32.mrf.mxu0
    %892 = vmatprep.mubr.bf16.mxu0 %v487
    %893 = vmatmul.mubr.bf16.gmra.mxu0 %v486
    %v894 = vpop.f32.mrf.mxu0
    %v895 = vadd.f32 0.0, %v894
    %v896 = vpop.f32.mrf.mxu0
    %v897 = vpop.f32.mrf.mxu0
    %v898 = vadd.f32 0.0, %v897
    %v899 = vpop.f32.mrf.mxu0
    %900 = vmatprep.mubr.bf16.mxu0 %v489
    %901 = vmatmul.mubr.bf16.gmra.mxu0 %v488
    %v902 = vpop.f32.mrf.mxu0
    %v903 = vadd.f32 0.0, %v902
    %v904 = vpop.f32.mrf.mxu0
    %v905 = vpop.f32.mrf.mxu0
    %v906 = vadd.f32 0.0, %v905
    %v907 = vpop.f32.mrf.mxu0
    %908 = vmatprep.mubr.bf16.mxu0 %v491
    %909 = vmatmul.mubr.bf16.gmra.mxu0 %v490
    %v910 = vpop.f32.mrf.mxu0
    %v911 = vadd.f32 0.0, %v910
    %v912 = vpop.f32.mrf.mxu0
    %v913 = vpop.f32.mrf.mxu0
    %v914 = vadd.f32 0.0, %v913
    %v915 = vpop.f32.mrf.mxu0
    %916 = vmatprep.mubr.bf16.mxu0 %v493
    %917 = vmatmul.mubr.bf16.gmra.mxu0 %v492
    %v918 = vpop.f32.mrf.mxu0
    %v919 = vadd.f32 0.0, %v918
    %v920 = vpop.f32.mrf.mxu0
    %v921 = vpop.f32.mrf.mxu0
    %v922 = vadd.f32 0.0, %v921
    %v923 = vpop.f32.mrf.mxu0
    %924 = vmatprep.mubr.bf16.mxu0 %v495
    %925 = vmatmul.mubr.bf16.gmra.mxu0 %v494
    %v926 = vpop.f32.mrf.mxu0
    %v927 = vadd.f32 0.0, %v926
    %v928 = vpop.f32.mrf.mxu0
    %v929 = vpop.f32.mrf.mxu0
    %v930 = vadd.f32 0.0, %v929
    %v931 = vpop.f32.mrf.mxu0
    %932 = vmatprep.mubr.bf16.mxu0 %v497
    %933 = vmatmul.mubr.bf16.gmra.mxu0 %v496
    %v934 = vpop.f32.mrf.mxu0
    %v935 = vadd.f32 0.0, %v934
    %v936 = vpop.f32.mrf.mxu0
    %v937 = vpop.f32.mrf.mxu0
    %v938 = vadd.f32 0.0, %v937
    %v939 = vpop.f32.mrf.mxu0
    %940 = vmatprep.mubr.bf16.mxu0 %v499
    %941 = vmatmul.mubr.bf16.gmra.mxu0 %v498
    %v942 = vpop.f32.mrf.mxu0
    %v943 = vadd.f32 0.0, %v942
    %v944 = vpop.f32.mrf.mxu0
    %v945 = vpop.f32.mrf.mxu0
    %v946 = vadd.f32 0.0, %v945
    %v947 = vpop.f32.mrf.mxu0
    %948 = vdwg.mxu0
    %v949 = vadd.f32 %v84, %v695
    %v950 = vadd.f32 %v85, %v698
    %v951 = vadd.f32 %v86, %v703
    %v952 = vadd.f32 %v87, %v706
    %v953 = vadd.f32 %v88, %v711
    %v954 = vadd.f32 %v89, %v714
    %v955 = vadd.f32 %v90, %v719
    %v956 = vadd.f32 %v91, %v722
    %v957 = vadd.f32 %v92, %v727
    %v958 = vadd.f32 %v93, %v730
    %v959 = vadd.f32 %v94, %v735
    %v960 = vadd.f32 %v95, %v738
    %v961 = vadd.f32 %v96, %v743
    %v962 = vadd.f32 %v97, %v746
    %v963 = vadd.f32 %v98, %v751
    %v964 = vadd.f32 %v99, %v754
    %v965 = vadd.f32 %v100, %v759
    %v966 = vadd.f32 %v101, %v762
    %v967 = vadd.f32 %v102, %v767
    %v968 = vadd.f32 %v103, %v770
    %v969 = vadd.f32 %v104, %v775
    %v970 = vadd.f32 %v105, %v778
    %v971 = vadd.f32 %v106, %v783
    %v972 = vadd.f32 %v107, %v786
    %v973 = vadd.f32 %v108, %v791
    %v974 = vadd.f32 %v109, %v794
    %v975 = vadd.f32 %v110, %v799
    %v976 = vadd.f32 %v111, %v802
    %v977 = vadd.f32 %v112, %v807
    %v978 = vadd.f32 %v113, %v810
    %v979 = vadd.f32 %v114, %v815
    %v980 = vadd.f32 %v115, %v818
    %v981 = vadd.f32 %v116, %v823
    %v982 = vadd.f32 %v117, %v826
    %v983 = vadd.f32 %v118, %v831
    %v984 = vadd.f32 %v119, %v834
    %v985 = vadd.f32 %v120, %v839
    %v986 = vadd.f32 %v121, %v842
    %v987 = vadd.f32 %v122, %v847
    %v988 = vadd.f32 %v123, %v850
    %v989 = vadd.f32 %v124, %v855
    %v990 = vadd.f32 %v125, %v858
    %v991 = vadd.f32 %v126, %v863
    %v992 = vadd.f32 %v127, %v866
    %v993 = vadd.f32 %v128, %v871
    %v994 = vadd.f32 %v129, %v874
    %v995 = vadd.f32 %v130, %v879
    %v996 = vadd.f32 %v131, %v882
    %v997 = vadd.f32 %v132, %v887
    %v998 = vadd.f32 %v133, %v890
    %v999 = vadd.f32 %v134, %v895
    %v1000 = vadd.f32 %v135, %v898
    %v1001 = vadd.f32 %v136, %v903
    %v1002 = vadd.f32 %v137, %v906
    %v1003 = vadd.f32 %v138, %v911
    %v1004 = vadd.f32 %v139, %v914
    %v1005 = vadd.f32 %v140, %v919
    %v1006 = vadd.f32 %v141, %v922
    %v1007 = vadd.f32 %v142, %v927
    %v1008 = vadd.f32 %v143, %v930
    %v1009 = vadd.f32 %v144, %v935
    %v1010 = vadd.f32 %v145, %v938
    %v1011 = vadd.f32 %v146, %v943
    %v1012 = vadd.f32 %v147, %v946
    %1013 = vst [vmem:[#allocation2] sm:$0xff] %v949
    %1014 = vst [vmem:[#allocation2 + $0x8] sm:$0xff] %v950
    %1015 = vst [vmem:[#allocation2 + $0x10] sm:$0xff] %v951
    %1016 = vst [vmem:[#allocation2 + $0x18] sm:$0xff] %v952
    %1017 = vst [vmem:[#allocation2 + $0x20] sm:$0xff] %v953
    %1018 = vst [vmem:[#allocation2 + $0x28] sm:$0xff] %v954
    %1019 = vst [vmem:[#allocation2 + $0x30] sm:$0xff] %v955
    %1020 = vst [vmem:[#allocation2 + $0x38] sm:$0xff] %v956
    %1021 = vst [vmem:[#allocation2 + $0x40] sm:$0xff] %v957
    %1022 = vst [vmem:[#allocation2 + $0x48] sm:$0xff] %v958
    %1023 = vst [vmem:[#allocation2 + $0x50] sm:$0xff] %v959
    %1024 = vst [vmem:[#allocation2 + $0x58] sm:$0xff] %v960
    %1025 = vst [vmem:[#allocation2 + $0x60] sm:$0xff] %v961
    %1026 = vst [vmem:[#allocation2 + $0x68] sm:$0xff] %v962
    %1027 = vst [vmem:[#allocation2 + $0x70] sm:$0xff] %v963
    %1028 = vst [vmem:[#allocation2 + $0x78] sm:$0xff] %v964
    %1029 = vst [vmem:[#allocation2 + $0x80] sm:$0xff] %v965
    %1030 = vst [vmem:[#allocation2 + $0x88] sm:$0xff] %v966
    %1031 = vst [vmem:[#allocation2 + $0x90] sm:$0xff] %v967
    %1032 = vst [vmem:[#allocation2 + $0x98] sm:$0xff] %v968
    %1033 = vst [vmem:[#allocation2 + $0xa0] sm:$0xff] %v969
    %1034 = vst [vmem:[#allocation2 + $0xa8] sm:$0xff] %v970
    %1035 = vst [vmem:[#allocation2 + $0xb0] sm:$0xff] %v971
    %1036 = vst [vmem:[#allocation2 + $0xb8] sm:$0xff] %v972
    %1037 = vst [vmem:[#allocation2 + $0xc0] sm:$0xff] %v973
    %1038 = vst [vmem:[#allocation2 + $0xc8] sm:$0xff] %v974
    %1039 = vst [vmem:[#allocation2 + $0xd0] sm:$0xff] %v975
    %1040 = vst [vmem:[#allocation2 + $0xd8] sm:$0xff] %v976
    %1041 = vst [vmem:[#allocation2 + $0xe0] sm:$0xff] %v977
    %1042 = vst [vmem:[#allocation2 + $0xe8] sm:$0xff] %v978
    %1043 = vst [vmem:[#allocation2 + $0xf0] sm:$0xff] %v979
    %1044 = vst [vmem:[#allocation2 + $0xf8] sm:$0xff] %v980
    %1045 = vst [vmem:[#allocation2 + $0x100] sm:$0xff] %v981
    %1046 = vst [vmem:[#allocation2 + $0x108] sm:$0xff] %v982
    %1047 = vst [vmem:[#allocation2 + $0x110] sm:$0xff] %v983
    %1048 = vst [vmem:[#allocation2 + $0x118] sm:$0xff] %v984
    %1049 = vst [vmem:[#allocation2 + $0x120] sm:$0xff] %v985
    %1050 = vst [vmem:[#allocation2 + $0x128] sm:$0xff] %v986
    %1051 = vst [vmem:[#allocation2 + $0x130] sm:$0xff] %v987
    %1052 = vst [vmem:[#allocation2 + $0x138] sm:$0xff] %v988
    %1053 = vst [vmem:[#allocation2 + $0x140] sm:$0xff] %v989
    %1054 = vst [vmem:[#allocation2 + $0x148] sm:$0xff] %v990
    %1055 = vst [vmem:[#allocation2 + $0x150] sm:$0xff] %v991
    %1056 = vst [vmem:[#allocation2 + $0x158] sm:$0xff] %v992
    %1057 = vst [vmem:[#allocation2 + $0x160] sm:$0xff] %v993
    %1058 = vst [vmem:[#allocation2 + $0x168] sm:$0xff] %v994
    %1059 = vst [vmem:[#allocation2 + $0x170] sm:$0xff] %v995
    %1060 = vst [vmem:[#allocation2 + $0x178] sm:$0xff] %v996
    %1061 = vst [vmem:[#allocation2 + $0x180] sm:$0xff] %v997
    %1062 = vst [vmem:[#allocation2 + $0x188] sm:$0xff] %v998
    %1063 = vst [vmem:[#allocation2 + $0x190] sm:$0xff] %v999
    %1064 = vst [vmem:[#allocation2 + $0x198] sm:$0xff] %v1000
    %1065 = vst [vmem:[#allocation2 + $0x1a0] sm:$0xff] %v1001
    %1066 = vst [vmem:[#allocation2 + $0x1a8] sm:$0xff] %v1002
    %1067 = vst [vmem:[#allocation2 + $0x1b0] sm:$0xff] %v1003
    %1068 = vst [vmem:[#allocation2 + $0x1b8] sm:$0xff] %v1004
    %1069 = vst [vmem:[#allocation2 + $0x1c0] sm:$0xff] %v1005
    %1070 = vst [vmem:[#allocation2 + $0x1c8] sm:$0xff] %v1006
    %1071 = vst [vmem:[#allocation2 + $0x1d0] sm:$0xff] %v1007
    %1072 = vst [vmem:[#allocation2 + $0x1d8] sm:$0xff] %v1008
    %1073 = vst [vmem:[#allocation2 + $0x1e0] sm:$0xff] %v1009
    %1074 = vst [vmem:[#allocation2 + $0x1e8] sm:$0xff] %v1010
    %1075 = vst [vmem:[#allocation2 + $0x1f0] sm:$0xff] %v1011
    %1076 = vst [vmem:[#allocation2 + $0x1f8] sm:$0xff] %v1012
    // Predicated region
    $region18: #{_conv_bn_impl.1} parent=1 // pred_check
      %p1077 = pneg %p16
    $region19: #{_conv_bn_impl.1} parent=1 // pred_check_branch
      %1079 = sbr.rel (%p1077) target = $region21
    $region20: #{_conv_bn_impl.1} parent=1 // pred_region
      %v1080 = vld [vmem:[#allocation2] sm:$0xff]
      %v1081 = vld [vmem:[#allocation2 + $0x8] sm:$0xff]
      %v1082 = vld [vmem:[#allocation2 + $0x10] sm:$0xff]
      %v1083 = vld [vmem:[#allocation2 + $0x18] sm:$0xff]
      %v1084 = vld [vmem:[#allocation2 + $0x20] sm:$0xff]
      %v1085 = vld [vmem:[#allocation2 + $0x28] sm:$0xff]
      %v1086 = vld [vmem:[#allocation2 + $0x30] sm:$0xff]
      %v1087 = vld [vmem:[#allocation2 + $0x38] sm:$0xff]
      %v1088 = vld [vmem:[#allocation2 + $0x40] sm:$0xff]
      %v1089 = vld [vmem:[#allocation2 + $0x48] sm:$0xff]
      %v1090 = vld [vmem:[#allocation2 + $0x50] sm:$0xff]
      %v1091 = vld [vmem:[#allocation2 + $0x58] sm:$0xff]
      %v1092 = vld [vmem:[#allocation2 + $0x60] sm:$0xff]
      %v1093 = vld [vmem:[#allocation2 + $0x68] sm:$0xff]
      %v1094 = vld [vmem:[#allocation2 + $0x70] sm:$0xff]
      %v1095 = vld [vmem:[#allocation2 + $0x78] sm:$0xff]
      %v1096 = vld [vmem:[#allocation2 + $0x80] sm:$0xff]
      %v1097 = vld [vmem:[#allocation2 + $0x88] sm:$0xff]
      %v1098 = vld [vmem:[#allocation2 + $0x90] sm:$0xff]
      %v1099 = vld [vmem:[#allocation2 + $0x98] sm:$0xff]
      %v1100 = vld [vmem:[#allocation2 + $0xa0] sm:$0xff]
      %v1101 = vld [vmem:[#allocation2 + $0xa8] sm:$0xff]
      %v1102 = vld [vmem:[#allocation2 + $0xb0] sm:$0xff]
      %v1103 = vld [vmem:[#allocation2 + $0xb8] sm:$0xff]
      %v1104 = vld [vmem:[#allocation2 + $0xc0] sm:$0xff]
      %v1105 = vld [vmem:[#allocation2 + $0xc8] sm:$0xff]
      %v1106 = vld [vmem:[#allocation2 + $0xd0] sm:$0xff]
      %v1107 = vld [vmem:[#allocation2 + $0xd8] sm:$0xff]
      %v1108 = vld [vmem:[#allocation2 + $0xe0] sm:$0xff]
      %v1109 = vld [vmem:[#allocation2 + $0xe8] sm:$0xff]
      %v1110 = vld [vmem:[#allocation2 + $0xf0] sm:$0xff]
      %v1111 = vld [vmem:[#allocation2 + $0xf8] sm:$0xff]
      %v1112 = vld [vmem:[#allocation2 + $0x100] sm:$0xff]
      %v1113 = vld [vmem:[#allocation2 + $0x108] sm:$0xff]
      %v1114 = vld [vmem:[#allocation2 + $0x110] sm:$0xff]
      %v1115 = vld [vmem:[#allocation2 + $0x118] sm:$0xff]
      %v1116 = vld [vmem:[#allocation2 + $0x120] sm:$0xff]
      %v1117 = vld [vmem:[#allocation2 + $0x128] sm:$0xff]
      %v1118 = vld [vmem:[#allocation2 + $0x130] sm:$0xff]
      %v1119 = vld [vmem:[#allocation2 + $0x138] sm:$0xff]
      %v1120 = vld [vmem:[#allocation2 + $0x140] sm:$0xff]
      %v1121 = vld [vmem:[#allocation2 + $0x148] sm:$0xff]
      %v1122 = vld [vmem:[#allocation2 + $0x150] sm:$0xff]
      %v1123 = vld [vmem:[#allocation2 + $0x158] sm:$0xff]
      %v1124 = vld [vmem:[#allocation2 + $0x160] sm:$0xff]
      %v1125 = vld [vmem:[#allocation2 + $0x168] sm:$0xff]
      %v1126 = vld [vmem:[#allocation2 + $0x170] sm:$0xff]
      %v1127 = vld [vmem:[#allocation2 + $0x178] sm:$0xff]
      %v1128 = vld [vmem:[#allocation2 + $0x180] sm:$0xff]
      %v1129 = vld [vmem:[#allocation2 + $0x188] sm:$0xff]
      %v1130 = vld [vmem:[#allocation2 + $0x190] sm:$0xff]
      %v1131 = vld [vmem:[#allocation2 + $0x198] sm:$0xff]
      %v1132 = vld [vmem:[#allocation2 + $0x1a0] sm:$0xff]
      %v1133 = vld [vmem:[#allocation2 + $0x1a8] sm:$0xff]
      %v1134 = vld [vmem:[#allocation2 + $0x1b0] sm:$0xff]
      %v1135 = vld [vmem:[#allocation2 + $0x1b8] sm:$0xff]
      %v1136 = vld [vmem:[#allocation2 + $0x1c0] sm:$0xff]
      %v1137 = vld [vmem:[#allocation2 + $0x1c8] sm:$0xff]
      %v1138 = vld [vmem:[#allocation2 + $0x1d0] sm:$0xff]
      %v1139 = vld [vmem:[#allocation2 + $0x1d8] sm:$0xff]
      %v1140 = vld [vmem:[#allocation2 + $0x1e0] sm:$0xff]
      %v1141 = vld [vmem:[#allocation2 + $0x1e8] sm:$0xff]
      %v1142 = vld [vmem:[#allocation2 + $0x1f0] sm:$0xff]
      %v1143 = vld [vmem:[#allocation2 + $0x1f8] sm:$0xff]
      %v1144 = vld [vmem:[%s2] sm:$0x1]
      %v1146 = vlaneseq
      %v1147 = vshrl.u32 %v1146, 7
      %v1148 = vsub.s32 0, %v1147
      %v1149 = vrot.slane %v1144, %v1148
      %v1151 = vadd.f32 %v1080, %v1149
      %v1152 = vadd.f32 %v1081, %v1149
      %v1153 = vadd.f32 %v1082, %v1149
      %v1154 = vadd.f32 %v1083, %v1149
      %v1155 = vadd.f32 %v1084, %v1149
      %v1156 = vadd.f32 %v1085, %v1149
      %v1157 = vadd.f32 %v1086, %v1149
      %v1158 = vadd.f32 %v1087, %v1149
      %v1159 = vadd.f32 %v1088, %v1149
      %v1160 = vadd.f32 %v1089, %v1149
      %v1161 = vadd.f32 %v1090, %v1149
      %v1162 = vadd.f32 %v1091, %v1149
      %v1163 = vadd.f32 %v1092, %v1149
      %v1164 = vadd.f32 %v1093, %v1149
      %v1165 = vadd.f32 %v1094, %v1149
      %v1166 = vadd.f32 %v1095, %v1149
      %v1167 = vadd.f32 %v1096, %v1149
      %v1168 = vadd.f32 %v1097, %v1149
      %v1169 = vadd.f32 %v1098, %v1149
      %v1170 = vadd.f32 %v1099, %v1149
      %v1171 = vadd.f32 %v1100, %v1149
      %v1172 = vadd.f32 %v1101, %v1149
      %v1173 = vadd.f32 %v1102, %v1149
      %v1174 = vadd.f32 %v1103, %v1149
      %v1175 = vadd.f32 %v1104, %v1149
      %v1176 = vadd.f32 %v1105, %v1149
      %v1177 = vadd.f32 %v1106, %v1149
      %v1178 = vadd.f32 %v1107, %v1149
      %v1179 = vadd.f32 %v1108, %v1149
      %v1180 = vadd.f32 %v1109, %v1149
      %v1181 = vadd.f32 %v1110, %v1149
      %v1182 = vadd.f32 %v1111, %v1149
      %v1183 = vadd.f32 %v1112, %v1149
      %v1184 = vadd.f32 %v1113, %v1149
      %v1185 = vadd.f32 %v1114, %v1149
      %v1186 = vadd.f32 %v1115, %v1149
      %v1187 = vadd.f32 %v1116, %v1149
      %v1188 = vadd.f32 %v1117, %v1149
      %v1189 = vadd.f32 %v1118, %v1149
      %v1190 = vadd.f32 %v1119, %v1149
      %v1191 = vadd.f32 %v1120, %v1149
      %v1192 = vadd.f32 %v1121, %v1149
      %v1193 = vadd.f32 %v1122, %v1149
      %v1194 = vadd.f32 %v1123, %v1149
      %v1195 = vadd.f32 %v1124, %v1149
      %v1196 = vadd.f32 %v1125, %v1149
      %v1197 = vadd.f32 %v1126, %v1149
      %v1198 = vadd.f32 %v1127, %v1149
      %v1199 = vadd.f32 %v1128, %v1149
      %v1200 = vadd.f32 %v1129, %v1149
      %v1201 = vadd.f32 %v1130, %v1149
      %v1202 = vadd.f32 %v1131, %v1149
      %v1203 = vadd.f32 %v1132, %v1149
      %v1204 = vadd.f32 %v1133, %v1149
      %v1205 = vadd.f32 %v1134, %v1149
      %v1206 = vadd.f32 %v1135, %v1149
      %v1207 = vadd.f32 %v1136, %v1149
      %v1208 = vadd.f32 %v1137, %v1149
      %v1209 = vadd.f32 %v1138, %v1149
      %v1210 = vadd.f32 %v1139, %v1149
      %v1211 = vadd.f32 %v1140, %v1149
      %v1212 = vadd.f32 %v1141, %v1149
      %v1213 = vadd.f32 %v1142, %v1149
      %v1214 = vadd.f32 %v1143, %v1149
      %v1215 = vmax.f32 %v1151, 0.0
      %v1216 = vmax.f32 %v1152, 0.0
      %v1217 = vmax.f32 %v1153, 0.0
      %v1218 = vmax.f32 %v1154, 0.0
      %v1219 = vmax.f32 %v1155, 0.0
      %v1220 = vmax.f32 %v1156, 0.0
      %v1221 = vmax.f32 %v1157, 0.0
      %v1222 = vmax.f32 %v1158, 0.0
      %v1223 = vmax.f32 %v1159, 0.0
      %v1224 = vmax.f32 %v1160, 0.0
      %v1225 = vmax.f32 %v1161, 0.0
      %v1226 = vmax.f32 %v1162, 0.0
      %v1227 = vmax.f32 %v1163, 0.0
      %v1228 = vmax.f32 %v1164, 0.0
      %v1229 = vmax.f32 %v1165, 0.0
      %v1230 = vmax.f32 %v1166, 0.0
      %v1231 = vmax.f32 %v1167, 0.0
      %v1232 = vmax.f32 %v1168, 0.0
      %v1233 = vmax.f32 %v1169, 0.0
      %v1234 = vmax.f32 %v1170, 0.0
      %v1235 = vmax.f32 %v1171, 0.0
      %v1236 = vmax.f32 %v1172, 0.0
      %v1237 = vmax.f32 %v1173, 0.0
      %v1238 = vmax.f32 %v1174, 0.0
      %v1239 = vmax.f32 %v1175, 0.0
      %v1240 = vmax.f32 %v1176, 0.0
      %v1241 = vmax.f32 %v1177, 0.0
      %v1242 = vmax.f32 %v1178, 0.0
      %v1243 = vmax.f32 %v1179, 0.0
      %v1244 = vmax.f32 %v1180, 0.0
      %v1245 = vmax.f32 %v1181, 0.0
      %v1246 = vmax.f32 %v1182, 0.0
      %v1247 = vmax.f32 %v1183, 0.0
      %v1248 = vmax.f32 %v1184, 0.0
      %v1249 = vmax.f32 %v1185, 0.0
      %v1250 = vmax.f32 %v1186, 0.0
      %v1251 = vmax.f32 %v1187, 0.0
      %v1252 = vmax.f32 %v1188, 0.0
      %v1253 = vmax.f32 %v1189, 0.0
      %v1254 = vmax.f32 %v1190, 0.0
      %v1255 = vmax.f32 %v1191, 0.0
      %v1256 = vmax.f32 %v1192, 0.0
      %v1257 = vmax.f32 %v1193, 0.0
      %v1258 = vmax.f32 %v1194, 0.0
      %v1259 = vmax.f32 %v1195, 0.0
      %v1260 = vmax.f32 %v1196, 0.0
      %v1261 = vmax.f32 %v1197, 0.0
      %v1262 = vmax.f32 %v1198, 0.0
      %v1263 = vmax.f32 %v1199, 0.0
      %v1264 = vmax.f32 %v1200, 0.0
      %v1265 = vmax.f32 %v1201, 0.0
      %v1266 = vmax.f32 %v1202, 0.0
      %v1267 = vmax.f32 %v1203, 0.0
      %v1268 = vmax.f32 %v1204, 0.0
      %v1269 = vmax.f32 %v1205, 0.0
      %v1270 = vmax.f32 %v1206, 0.0
      %v1271 = vmax.f32 %v1207, 0.0
      %v1272 = vmax.f32 %v1208, 0.0
      %v1273 = vmax.f32 %v1209, 0.0
      %v1274 = vmax.f32 %v1210, 0.0
      %v1275 = vmax.f32 %v1211, 0.0
      %v1276 = vmax.f32 %v1212, 0.0
      %v1277 = vmax.f32 %v1213, 0.0
      %v1278 = vmax.f32 %v1214, 0.0
      %v1279 = vpack.c.bf16 %v1216, %v1215
      %v1280 = vpack.c.bf16 %v1218, %v1217
      %v1281 = vpack.c.bf16 %v1220, %v1219
      %v1282 = vpack.c.bf16 %v1222, %v1221
      %v1283 = vpack.c.bf16 %v1224, %v1223
      %v1284 = vpack.c.bf16 %v1226, %v1225
      %v1285 = vpack.c.bf16 %v1228, %v1227
      %v1286 = vpack.c.bf16 %v1230, %v1229
      %v1287 = vpack.c.bf16 %v1232, %v1231
      %v1288 = vpack.c.bf16 %v1234, %v1233
      %v1289 = vpack.c.bf16 %v1236, %v1235
      %v1290 = vpack.c.bf16 %v1238, %v1237
      %v1291 = vpack.c.bf16 %v1240, %v1239
      %v1292 = vpack.c.bf16 %v1242, %v1241
      %v1293 = vpack.c.bf16 %v1244, %v1243
      %v1294 = vpack.c.bf16 %v1246, %v1245
      %v1295 = vpack.c.bf16 %v1248, %v1247
      %v1296 = vpack.c.bf16 %v1250, %v1249
      %v1297 = vpack.c.bf16 %v1252, %v1251
      %v1298 = vpack.c.bf16 %v1254, %v1253
      %v1299 = vpack.c.bf16 %v1256, %v1255
      %v1300 = vpack.c.bf16 %v1258, %v1257
      %v1301 = vpack.c.bf16 %v1260, %v1259
      %v1302 = vpack.c.bf16 %v1262, %v1261
      %v1303 = vpack.c.bf16 %v1264, %v1263
      %v1304 = vpack.c.bf16 %v1266, %v1265
      %v1305 = vpack.c.bf16 %v1268, %v1267
      %v1306 = vpack.c.bf16 %v1270, %v1269
      %v1307 = vpack.c.bf16 %v1272, %v1271
      %v1308 = vpack.c.bf16 %v1274, %v1273
      %v1309 = vpack.c.bf16 %v1276, %v1275
      %v1310 = vpack.c.bf16 %v1278, %v1277
      %v1343 = vunpack.c.l.b16 %v1279
      %v1344 = vunpack.c.h.b16 %v1279
      %v1345 = vunpack.c.l.b16 %v1280
      %v1346 = vunpack.c.h.b16 %v1280
      %v1347 = vunpack.c.l.b16 %v1281
      %v1348 = vunpack.c.h.b16 %v1281
      %v1349 = vunpack.c.l.b16 %v1282
      %v1350 = vunpack.c.h.b16 %v1282
      %v1351 = vunpack.c.l.b16 %v1283
      %v1352 = vunpack.c.h.b16 %v1283
      %v1353 = vunpack.c.l.b16 %v1284
      %v1354 = vunpack.c.h.b16 %v1284
      %v1355 = vunpack.c.l.b16 %v1285
      %v1356 = vunpack.c.h.b16 %v1285
      %v1357 = vunpack.c.l.b16 %v1286
      %v1358 = vunpack.c.h.b16 %v1286
      %v1359 = vunpack.c.l.b16 %v1287
      %v1360 = vunpack.c.h.b16 %v1287
      %v1361 = vunpack.c.l.b16 %v1288
      %v1362 = vunpack.c.h.b16 %v1288
      %v1363 = vunpack.c.l.b16 %v1289
      %v1364 = vunpack.c.h.b16 %v1289
      %v1365 = vunpack.c.l.b16 %v1290
      %v1366 = vunpack.c.h.b16 %v1290
      %v1367 = vunpack.c.l.b16 %v1291
      %v1368 = vunpack.c.h.b16 %v1291
      %v1369 = vunpack.c.l.b16 %v1292
      %v1370 = vunpack.c.h.b16 %v1292
      %v1371 = vunpack.c.l.b16 %v1293
      %v1372 = vunpack.c.h.b16 %v1293
      %v1373 = vunpack.c.l.b16 %v1294
      %v1374 = vunpack.c.h.b16 %v1294
      %v1375 = vunpack.c.l.b16 %v1295
      %v1376 = vunpack.c.h.b16 %v1295
      %v1377 = vunpack.c.l.b16 %v1296
      %v1378 = vunpack.c.h.b16 %v1296
      %v1379 = vunpack.c.l.b16 %v1297
      %v1380 = vunpack.c.h.b16 %v1297
      %v1381 = vunpack.c.l.b16 %v1298
      %v1382 = vunpack.c.h.b16 %v1298
      %v1383 = vunpack.c.l.b16 %v1299
      %v1384 = vunpack.c.h.b16 %v1299
      %v1385 = vunpack.c.l.b16 %v1300
      %v1386 = vunpack.c.h.b16 %v1300
      %v1387 = vunpack.c.l.b16 %v1301
      %v1388 = vunpack.c.h.b16 %v1301
      %v1389 = vunpack.c.l.b16 %v1302
      %v1390 = vunpack.c.h.b16 %v1302
      %v1391 = vunpack.c.l.b16 %v1303
      %v1392 = vunpack.c.h.b16 %v1303
      %v1393 = vunpack.c.l.b16 %v1304
      %v1394 = vunpack.c.h.b16 %v1304
      %v1395 = vunpack.c.l.b16 %v1305
      %v1396 = vunpack.c.h.b16 %v1305
      %v1397 = vunpack.c.l.b16 %v1306
      %v1398 = vunpack.c.h.b16 %v1306
      %v1399 = vunpack.c.l.b16 %v1307
      %v1400 = vunpack.c.h.b16 %v1307
      %v1401 = vunpack.c.l.b16 %v1308
      %v1402 = vunpack.c.h.b16 %v1308
      %v1403 = vunpack.c.l.b16 %v1309
      %v1404 = vunpack.c.h.b16 %v1309
      %v1405 = vunpack.c.l.b16 %v1310
      %v1406 = vunpack.c.h.b16 %v1310
      %v1407 = vpack.c.b16 %v1343, %v1343
      %v1408 = vpack.c.b16 %v1344, %v1344
      %v1409 = vpack.c.b16 %v1345, %v1345
      %v1410 = vpack.c.b16 %v1346, %v1346
      %v1411 = vpack.c.b16 %v1347, %v1347
      %v1412 = vpack.c.b16 %v1348, %v1348
      %v1413 = vpack.c.b16 %v1349, %v1349
      %v1414 = vpack.c.b16 %v1350, %v1350
      %v1415 = vpack.c.b16 %v1351, %v1351
      %v1416 = vpack.c.b16 %v1352, %v1352
      %v1417 = vpack.c.b16 %v1353, %v1353
      %v1418 = vpack.c.b16 %v1354, %v1354
      %v1419 = vpack.c.b16 %v1355, %v1355
      %v1420 = vpack.c.b16 %v1356, %v1356
      %v1421 = vpack.c.b16 %v1357, %v1357
      %v1422 = vpack.c.b16 %v1358, %v1358
      %v1423 = vpack.c.b16 %v1359, %v1359
      %v1424 = vpack.c.b16 %v1360, %v1360
      %v1425 = vpack.c.b16 %v1361, %v1361
      %v1426 = vpack.c.b16 %v1362, %v1362
      %v1427 = vpack.c.b16 %v1363, %v1363
      %v1428 = vpack.c.b16 %v1364, %v1364
      %v1429 = vpack.c.b16 %v1365, %v1365
      %v1430 = vpack.c.b16 %v1366, %v1366
      %v1431 = vpack.c.b16 %v1367, %v1367
      %v1432 = vpack.c.b16 %v1368, %v1368
      %v1433 = vpack.c.b16 %v1369, %v1369
      %v1434 = vpack.c.b16 %v1370, %v1370
      %v1435 = vpack.c.b16 %v1371, %v1371
      %v1436 = vpack.c.b16 %v1372, %v1372
      %v1437 = vpack.c.b16 %v1373, %v1373
      %v1438 = vpack.c.b16 %v1374, %v1374
      %v1439 = vpack.c.b16 %v1375, %v1375
      %v1440 = vpack.c.b16 %v1376, %v1376
      %v1441 = vpack.c.b16 %v1377, %v1377
      %v1442 = vpack.c.b16 %v1378, %v1378
      %v1443 = vpack.c.b16 %v1379, %v1379
      %v1444 = vpack.c.b16 %v1380, %v1380
      %v1445 = vpack.c.b16 %v1381, %v1381
      %v1446 = vpack.c.b16 %v1382, %v1382
      %v1447 = vpack.c.b16 %v1383, %v1383
      %v1448 = vpack.c.b16 %v1384, %v1384
      %v1449 = vpack.c.b16 %v1385, %v1385
      %v1450 = vpack.c.b16 %v1386, %v1386
      %v1451 = vpack.c.b16 %v1387, %v1387
      %v1452 = vpack.c.b16 %v1388, %v1388
      %v1453 = vpack.c.b16 %v1389, %v1389
      %v1454 = vpack.c.b16 %v1390, %v1390
      %v1455 = vpack.c.b16 %v1391, %v1391
      %v1456 = vpack.c.b16 %v1392, %v1392
      %v1457 = vpack.c.b16 %v1393, %v1393
      %v1458 = vpack.c.b16 %v1394, %v1394
      %v1459 = vpack.c.b16 %v1395, %v1395
      %v1460 = vpack.c.b16 %v1396, %v1396
      %v1461 = vpack.c.b16 %v1397, %v1397
      %v1462 = vpack.c.b16 %v1398, %v1398
      %v1463 = vpack.c.b16 %v1399, %v1399
      %v1464 = vpack.c.b16 %v1400, %v1400
      %v1465 = vpack.c.b16 %v1401, %v1401
      %v1466 = vpack.c.b16 %v1402, %v1402
      %v1467 = vpack.c.b16 %v1403, %v1403
      %v1468 = vpack.c.b16 %v1404, %v1404
      %v1469 = vpack.c.b16 %v1405, %v1405
      %v1470 = vpack.c.b16 %v1406, %v1406
      %1535 = vst [vmem:[#allocation3] sm:$0xf] %v1407
      %1536 = vst [vmem:[#allocation3 + $0x4] sm:$0xf] %v1408
      %1537 = vst [vmem:[#allocation3 + $0x8] sm:$0xf] %v1409
      %1538 = vst [vmem:[#allocation3 + $0xc] sm:$0xf] %v1410
      %1539 = vst [vmem:[#allocation3 + $0x10] sm:$0xf] %v1411
      %1540 = vst [vmem:[#allocation3 + $0x14] sm:$0xf] %v1412
      %1541 = vst [vmem:[#allocation3 + $0x18] sm:$0xf] %v1413
      %1542 = vst [vmem:[#allocation3 + $0x1c] sm:$0xf] %v1414
      %1543 = vst [vmem:[#allocation3 + $0x20] sm:$0xf] %v1415
      %1544 = vst [vmem:[#allocation3 + $0x24] sm:$0xf] %v1416
      %1545 = vst [vmem:[#allocation3 + $0x28] sm:$0xf] %v1417
      %1546 = vst [vmem:[#allocation3 + $0x2c] sm:$0xf] %v1418
      %1547 = vst [vmem:[#allocation3 + $0x30] sm:$0xf] %v1419
      %1548 = vst [vmem:[#allocation3 + $0x34] sm:$0xf] %v1420
      %1549 = vst [vmem:[#allocation3 + $0x38] sm:$0xf] %v1421
      %1550 = vst [vmem:[#allocation3 + $0x3c] sm:$0xf] %v1422
      %1551 = vst [vmem:[#allocation3 + $0x40] sm:$0xf] %v1423
      %1552 = vst [vmem:[#allocation3 + $0x44] sm:$0xf] %v1424
      %1553 = vst [vmem:[#allocation3 + $0x48] sm:$0xf] %v1425
      %1554 = vst [vmem:[#allocation3 + $0x4c] sm:$0xf] %v1426
      %1555 = vst [vmem:[#allocation3 + $0x50] sm:$0xf] %v1427
      %1556 = vst [vmem:[#allocation3 + $0x54] sm:$0xf] %v1428
      %1557 = vst [vmem:[#allocation3 + $0x58] sm:$0xf] %v1429
      %1558 = vst [vmem:[#allocation3 + $0x5c] sm:$0xf] %v1430
      %1559 = vst [vmem:[#allocation3 + $0x60] sm:$0xf] %v1431
      %1560 = vst [vmem:[#allocation3 + $0x64] sm:$0xf] %v1432
      %1561 = vst [vmem:[#allocation3 + $0x68] sm:$0xf] %v1433
      %1562 = vst [vmem:[#allocation3 + $0x6c] sm:$0xf] %v1434
      %1563 = vst [vmem:[#allocation3 + $0x70] sm:$0xf] %v1435
      %1564 = vst [vmem:[#allocation3 + $0x74] sm:$0xf] %v1436
      %1565 = vst [vmem:[#allocation3 + $0x78] sm:$0xf] %v1437
      %1566 = vst [vmem:[#allocation3 + $0x7c] sm:$0xf] %v1438
      %1567 = vst [vmem:[#allocation3 + $0x80] sm:$0xf] %v1439
      %1568 = vst [vmem:[#allocation3 + $0x84] sm:$0xf] %v1440
      %1569 = vst [vmem:[#allocation3 + $0x88] sm:$0xf] %v1441
      %1570 = vst [vmem:[#allocation3 + $0x8c] sm:$0xf] %v1442
      %1571 = vst [vmem:[#allocation3 + $0x90] sm:$0xf] %v1443
      %1572 = vst [vmem:[#allocation3 + $0x94] sm:$0xf] %v1444
      %1573 = vst [vmem:[#allocation3 + $0x98] sm:$0xf] %v1445
      %1574 = vst [vmem:[#allocation3 + $0x9c] sm:$0xf] %v1446
      %1575 = vst [vmem:[#allocation3 + $0xa0] sm:$0xf] %v1447
      %1576 = vst [vmem:[#allocation3 + $0xa4] sm:$0xf] %v1448
      %1577 = vst [vmem:[#allocation3 + $0xa8] sm:$0xf] %v1449
      %1578 = vst [vmem:[#allocation3 + $0xac] sm:$0xf] %v1450
      %1579 = vst [vmem:[#allocation3 + $0xb0] sm:$0xf] %v1451
      %1580 = vst [vmem:[#allocation3 + $0xb4] sm:$0xf] %v1452
      %1581 = vst [vmem:[#allocation3 + $0xb8] sm:$0xf] %v1453
      %1582 = vst [vmem:[#allocation3 + $0xbc] sm:$0xf] %v1454
      %1583 = vst [vmem:[#allocation3 + $0xc0] sm:$0xf] %v1455
      %1584 = vst [vmem:[#allocation3 + $0xc4] sm:$0xf] %v1456
      %1585 = vst [vmem:[#allocation3 + $0xc8] sm:$0xf] %v1457
      %1586 = vst [vmem:[#allocation3 + $0xcc] sm:$0xf] %v1458
      %1587 = vst [vmem:[#allocation3 + $0xd0] sm:$0xf] %v1459
      %1588 = vst [vmem:[#allocation3 + $0xd4] sm:$0xf] %v1460
      %1589 = vst [vmem:[#allocation3 + $0xd8] sm:$0xf] %v1461
      %1590 = vst [vmem:[#allocation3 + $0xdc] sm:$0xf] %v1462
      %1591 = vst [vmem:[#allocation3 + $0xe0] sm:$0xf] %v1463
      %1592 = vst [vmem:[#allocation3 + $0xe4] sm:$0xf] %v1464
      %1593 = vst [vmem:[#allocation3 + $0xe8] sm:$0xf] %v1465
      %1594 = vst [vmem:[#allocation3 + $0xec] sm:$0xf] %v1466
      %1595 = vst [vmem:[#allocation3 + $0xf0] sm:$0xf] %v1467
      %1596 = vst [vmem:[#allocation3 + $0xf4] sm:$0xf] %v1468
      %1597 = vst [vmem:[#allocation3 + $0xf8] sm:$0xf] %v1469
      %1598 = vst [vmem:[#allocation3 + $0xfc] sm:$0xf] %v1470
    $region21: #{_conv_bn_impl.1} parent=1 // pred_fallthru
      _
    // Predicated region
    $region22: #{_conv_bn_impl.1} parent=1 // pred_check
      _
    $region23: #{_conv_bn_impl.1} parent=1 // pred_check_branch
      %1600 = sbr.rel (0) target = $region25
    $region24: #{_conv_bn_impl.1} parent=1 // pred_region
      %s1602 = ssub.s32 4096, 4096
      %1603 = vsyncadd [#allocation4], %s1602
      %s1604 = sshll.u32 [#allocation3], 4
      %s1605 = int_to_ptr.vmem [resolvable:$true] %s1604
      %1610 = dma.vmem_to_hbm [thread:$0]  %s1605, 4096, %s3, [#allocation4], 64, 64, 4
    $region25: #{_conv_bn_impl.1} parent=1 // pred_fallthru
      _
    // Predicated region
    $region26: #{_conv_bn_impl.1} parent=1 // pred_check
      _
    $region27: #{_conv_bn_impl.1} parent=1 // pred_check_branch
      %1612 = sbr.rel (0) target = $region29
    $region28: #{_conv_bn_impl.1} parent=1 // pred_region
      %1613 = dma.done [#allocation4], 4096
    $region29: #{_conv_bn_impl.1} parent=1 // pred_fallthru
      _
    %1614 = vsyncpa [#allocation4], 1

</llo_original>
